<compile_context>
chip_gen: v7x
topology: tpu7x:2x2x1
jax: 0.10.0
libtpu: 0.0.40
codegen_flags: <defaults>
</compile_context>

<pallas_src>
import math
import functools

import jax
import jax.numpy as jnp
from jax import lax
from jax.experimental import pallas as pl
from jax.experimental.pallas import tpu as pltpu


def _choose_block_q(T, n_head, budget_bytes=8 * 1024 * 1024):
    """Largest multiple-of-8 divisor of T (<=512) whose double-buffered attn
    output tile (2 * n_head * bq * T * 4 bytes) fits the budget."""
    smallest = T
    for cand in range(min(T, 512), 7, -1):
        if T % cand == 0 and cand % 8 == 0:
            smallest = cand
            if 2 * n_head * cand * T * 4 <= budget_bytes:
                return cand
    return smallest  # fall back to smallest aligned divisor (or T itself)


def _attn_kernel(x_ref, wq_ref, bq_ref, wk_ref, bk_ref, wv_ref, bv_ref,
                 wo_ref, bo_ref,
                 ov_ref, attn_ref,
                 k_cache, v_cache, pv_ref,
                 *, n_head: int, block_q: int, softmax_mode: str):
    qi = pl.program_id(1)

    T, C = x_ref.shape[1], x_ref.shape[2]
    hd = C // n_head
    scale = 1.0 / math.sqrt(hd)

    # K/V projections: compute once per batch element (qi == 0), keep the bf16
    # results in VMEM scratch for all subsequent query tiles of this batch.
    @pl.when(qi == 0)
    def _():
        xf = x_ref[0].astype(jnp.bfloat16)            # (T, C)
        k = jnp.dot(xf, wk_ref[...], preferred_element_type=jnp.float32) + bk_ref[...]
        v = jnp.dot(xf, wv_ref[...], preferred_element_type=jnp.float32) + bv_ref[...]
        k_cache[...] = k.astype(jnp.bfloat16)
        v_cache[...] = v.astype(jnp.bfloat16)

    # Query rows for this tile (dynamic, block-aligned slice of the resident x).
    row0 = pl.multiple_of(qi * block_q, block_q)
    xq = x_ref[0, pl.ds(row0, block_q), :].astype(jnp.bfloat16)   # (TQ, C)

    # Q projection (bf16 MXU, f32 accumulation), fold in the 1/sqrt(hd) scale.
    q = jnp.dot(xq, wq_ref[...], preferred_element_type=jnp.float32) + bq_ref[...]
    q = (q * scale).astype(jnp.bfloat16)

    k = k_cache[...]                                  # (T, C) bf16
    v = v_cache[...]                                  # (T, C) bf16

    # Causal mask for this query tile: global row index = row0 + local row.
    row = lax.broadcasted_iota(jnp.int32, (block_q, T), 0) + row0
    col = lax.broadcasted_iota(jnp.int32, (block_q, T), 1)
    causal = col <= row

    # Contract the last dim of both operands (q @ k^T without an explicit .T).
    dn = (((1,), (1,)), ((), ()))

    for h in range(n_head):                           # n_head is static -> unrolled
        sl = slice(h * hd, (h + 1) * hd)

        s = lax.dot_general(q[:, sl], k[:, sl], dn,
                            preferred_element_type=jnp.float32)
        s = jnp.where(causal, s, -jnp.inf)

        m = jnp.max(s, axis=-1, keepdims=True)
        e = jnp.exp(s - m)
        denom = jnp.sum(e, axis=-1, keepdims=True)
        if softmax_mode == 'off1':
            # softmax_one: exp(x - max) / (1 + sum(exp(x - max)))
            denom = denom + 1.0
        p = e * pl.reciprocal(denom, approx=True)

        attn_ref[0, h] = p                            # (TQ, T) f32 writeback

        pv = jnp.dot(p.astype(jnp.bfloat16), v[:, sl],
                     preferred_element_type=jnp.float32)
        # Write this head's output at its static column offset (no concat).
        pv_ref[:, sl] = pv.astype(jnp.bfloat16)

    # Single full-width output projection over the assembled (TQ, C) slab.
    ov_ref[0] = (jnp.dot(pv_ref[...], wo_ref[...],
                         preferred_element_type=jnp.float32) + bo_ref[...])


def attn_forward(x, params, *, n_head: int, softmax_mode: str = 'vanilla',
                 block_q: int | None = None):
    """x: (B, T, C) float32. params: Wq..Wo of shape (C, C) in torch nn.Linear
    layout (out, in) and biases bq..bo of shape (C,)."""
    B, T, C = x.shape
    assert C % n_head == 0
    if block_q is None:
        block_q = _choose_block_q(T, n_head)
    assert T % block_q == 0
    num_q = T // block_q

    # Glue: pre-transpose weights to (in, out), cast to bf16 for the MXU;
    # biases stay f32 and are added post-accumulation.
    wq_t = params['Wq'].T.astype(jnp.bfloat16)
    wk_t = params['Wk'].T.astype(jnp.bfloat16)
    wv_t = params['Wv'].T.astype(jnp.bfloat16)
    wo_t = params['Wo'].T.astype(jnp.bfloat16)
    bq = params['bq'].reshape(1, C).astype(jnp.float32)
    bk = params['bk'].reshape(1, C).astype(jnp.float32)
    bv = params['bv'].reshape(1, C).astype(jnp.float32)
    bo = params['bo'].reshape(1, C).astype(jnp.float32)

    kernel = functools.partial(_attn_kernel, n_head=n_head, block_q=block_q,
                               softmax_mode=softmax_mode)

    x_spec = pl.BlockSpec((1, T, C), lambda b, qi: (b, 0, 0))   # resident per-batch
    w_spec = pl.BlockSpec((C, C), lambda b, qi: (0, 0))
    bias_spec = pl.BlockSpec((1, C), lambda b, qi: (0, 0))

    ov, attn = pl.pallas_call(
        kernel,
        out_shape=(
            jax.ShapeDtypeStruct((B, T, C), jnp.float32),
            jax.ShapeDtypeStruct((B, n_head, T, T), jnp.float32),
        ),
        grid_spec=pltpu.PrefetchScalarGridSpec(
            num_scalar_prefetch=0,
            grid=(B, num_q),
            in_specs=[
                x_spec,                      # x (full sequence, per batch)
                w_spec, bias_spec,           # Q
                w_spec, bias_spec,           # K
                w_spec, bias_spec,           # V
                w_spec, bias_spec,           # O
            ],
            out_specs=[
                pl.BlockSpec((1, block_q, C), lambda b, qi: (b, qi, 0)),
                pl.BlockSpec((1, n_head, block_q, T), lambda b, qi: (b, 0, qi, 0)),
            ],
            scratch_shapes=[
                pltpu.VMEM((T, C), jnp.bfloat16),        # K cache
                pltpu.VMEM((T, C), jnp.bfloat16),        # V cache
                pltpu.VMEM((block_q, C), jnp.bfloat16),  # per-head PV slab
            ],
        ),
        compiler_params=pltpu.CompilerParams(
            # qi is sequential (K/V cache computed at qi==0); batch is parallel.
            dimension_semantics=("parallel", "arbitrary"),
            vmem_limit_bytes=48 * 1024 * 1024,
        ),
    )(x, wq_t, bq, wk_t, bk, wv_t, bv, wo_t, bo)
    return ov, attn


def _reference(x, params, n_head, softmax_mode='vanilla'):
    """Pure-JAX f32 reference mirroring the PyTorch forward."""
    B, T, C = x.shape
    hd = C // n_head

    def lin(x, W, b):
        return x @ W.T + b

    q = lin(x, params['Wq'], params['bq']).reshape(B, T, n_head, hd).transpose(0, 2, 1, 3)
    k = lin(x, params['Wk'], params['bk']).reshape(B, T, n_head, hd).transpose(0, 2, 1, 3)
    v = lin(x, params['Wv'], params['bv']).reshape(B, T, n_head, hd).transpose(0, 2, 1, 3)
    qk = jnp.einsum('bhqd,bhkd->bhqk', q, k) / math.sqrt(hd)
    mask = jnp.triu(jnp.full((T, T), -jnp.inf), k=1)
    mqk = qk + mask[None, None]
    m = jnp.max(mqk, axis=-1, keepdims=True)
    e = jnp.exp(mqk - m)
    if softmax_mode == 'off1':
        p = e / (1.0 + jnp.sum(e, axis=-1, keepdims=True))
    else:
        p = e / jnp.sum(e, axis=-1, keepdims=True)
    ov = jnp.einsum('bhqk,bhkd->bhqd', p, v).transpose(0, 2, 1, 3).reshape(B, T, C)
    ov = lin(ov, params['Wo'], params['bo'])
    return ov, p


def init_params(key, embed_dim):
    """Deterministic nn.Linear-style init: U(-1/sqrt(in), 1/sqrt(in))."""
    bound = 1.0 / math.sqrt(embed_dim)
    keys = jax.random.split(key, 8)
    names_w = ['Wq', 'Wk', 'Wv', 'Wo']
    names_b = ['bq', 'bk', 'bv', 'bo']
    params = {}
    for i, (nw, nb) in enumerate(zip(names_w, names_b)):
        params[nw] = jax.random.uniform(keys[2 * i], (embed_dim, embed_dim),
                                        jnp.float32, -bound, bound)
        params[nb] = jax.random.uniform(keys[2 * i + 1], (embed_dim,),
                                        jnp.float32, -bound, bound)
    return params


if __name__ == "__main__":
    B, T, C, n_head = 2, 8, 32, 4
    key = jax.random.PRNGKey(0)
    kx, kp = jax.random.split(key)
    x = jax.random.normal(kx, (B, T, C), jnp.float32)
    params = init_params(kp, C)

    # bf16 MXU inputs + approximate reciprocal -> compare against the f32
    # reference with bf16-appropriate tolerances.
    for mode in ('vanilla', 'off1'):
        ov, attn = attn_forward(x, params, n_head=n_head, softmax_mode=mode)
        ov = jax.block_until_ready(ov)
        attn = jax.block_until_ready(attn)

        ov_ref, attn_ref = _reference(x, params, n_head, mode)
        assert jnp.allclose(ov, ov_ref, atol=5e-2, rtol=5e-2), f"OV mismatch ({mode})"
        assert jnp.allclose(attn, attn_ref, atol=5e-2, rtol=5e-2), f"attn_score mismatch ({mode})"

    print("KERNEL_OK")
</pallas_src>

<mosaic_0001>
module attributes {stable_mosaic.version = 11 : i64} {
  func.func @_attn_kernel(%arg0: i32, %arg1: i32, %arg2: memref<1x8x32xf32, #tpu.memory_space<vmem>>, %arg3: memref<32x32xbf16, #tpu.memory_space<vmem>>, %arg4: memref<1x32xf32, #tpu.memory_space<vmem>>, %arg5: memref<32x32xbf16, #tpu.memory_space<vmem>>, %arg6: memref<1x32xf32, #tpu.memory_space<vmem>>, %arg7: memref<32x32xbf16, #tpu.memory_space<vmem>>, %arg8: memref<1x32xf32, #tpu.memory_space<vmem>>, %arg9: memref<32x32xbf16, #tpu.memory_space<vmem>>, %arg10: memref<1x32xf32, #tpu.memory_space<vmem>>, %arg11: memref<1x8x32xf32, #tpu.memory_space<vmem>>, %arg12: memref<1x4x8x8xf32, #tpu.memory_space<vmem>>, %arg13: memref<8x32xbf16, #tpu.memory_space<vmem>>, %arg14: memref<8x32xbf16, #tpu.memory_space<vmem>>, %arg15: memref<8x32xbf16, #tpu.memory_space<vmem>>) attributes {dimension_semantics = [#tpu.dimension_semantics<parallel>, #tpu.dimension_semantics<arbitrary>], iteration_bounds = array<i64: 2, 1>, scalar_prefetch = 0 : i64, scratch_operands = 3 : i64, tpu.core_type = #tpu.core_type<tc>, window_params = [{transform_indices = @transform_0, window_bounds = array<i64: 1, 8, 32>}, {pipeline_mode = #tpu.pipeline_mode<synchronous>, transform_indices = @transform_1, window_bounds = array<i64: 32, 32>}, {pipeline_mode = #tpu.pipeline_mode<synchronous>, transform_indices = @transform_2, window_bounds = array<i64: 1, 32>}, {pipeline_mode = #tpu.pipeline_mode<synchronous>, transform_indices = @transform_3, window_bounds = array<i64: 32, 32>}, {pipeline_mode = #tpu.pipeline_mode<synchronous>, transform_indices = @transform_4, window_bounds = array<i64: 1, 32>}, {pipeline_mode = #tpu.pipeline_mode<synchronous>, transform_indices = @transform_5, window_bounds = array<i64: 32, 32>}, {pipeline_mode = #tpu.pipeline_mode<synchronous>, transform_indices = @transform_6, window_bounds = array<i64: 1, 32>}, {pipeline_mode = #tpu.pipeline_mode<synchronous>, transform_indices = @transform_7, window_bounds = array<i64: 32, 32>}, {pipeline_mode = #tpu.pipeline_mode<synchronous>, transform_indices = @transform_8, window_bounds = array<i64: 1, 32>}, {transform_indices = @transform_9, window_bounds = array<i64: 1, 8, 32>}, {transform_indices = @transform_10, window_bounds = array<i64: 1, 4, 8, 8>}]} {
    %c0_i32 = arith.constant 0 : i32
    %0 = arith.cmpi eq, %arg1, %c0_i32 : i32
    %1 = arith.extui %0 : i1 to i32
    %c0_i32_0 = arith.constant 0 : i32
    %2 = arith.cmpi ne, %1, %c0_i32_0 : i32
    scf.if %2 {
      %c0_59 = arith.constant 0 : index
      %c0_60 = arith.constant 0 : index
      %c0_61 = arith.constant 0 : index
      %125 = vector.load %arg2[%c0_59, %c0_60, %c0_61] : memref<1x8x32xf32, #tpu.memory_space<vmem>>, vector<1x8x32xf32>
      %126 = vector.shape_cast %125 : vector<1x8x32xf32> to vector<8x32xf32>
      %127 = arith.truncf %126 : vector<8x32xf32> to vector<8x32xbf16>
      %c0_62 = arith.constant 0 : index
      %c0_63 = arith.constant 0 : index
      %128 = vector.load %arg5[%c0_62, %c0_63] : memref<32x32xbf16, #tpu.memory_space<vmem>>, vector<32x32xbf16>
      %cst_64 = arith.constant dense<0.000000e+00> : vector<8x32xf32>
      %129 = tpu.matmul %127, %128, %cst_64 {dimension_numbers = #tpu.dot_dimension_numbers<[1], [0], [0], [1], [0, 0, 1, 1], [], []>} : vector<8x32xbf16>, vector<32x32xbf16>, vector<8x32xf32> -> vector<8x32xf32>
      %c0_65 = arith.constant 0 : index
      %c0_66 = arith.constant 0 : index
      %130 = vector.load %arg6[%c0_65, %c0_66] : memref<1x32xf32, #tpu.memory_space<vmem>>, vector<1x32xf32>
      %131 = vector.broadcast %130 : vector<1x32xf32> to vector<8x32xf32>
      %132 = arith.addf %129, %131 : vector<8x32xf32>
      %c0_67 = arith.constant 0 : index
      %c0_68 = arith.constant 0 : index
      %133 = vector.load %arg7[%c0_67, %c0_68] : memref<32x32xbf16, #tpu.memory_space<vmem>>, vector<32x32xbf16>
      %cst_69 = arith.constant dense<0.000000e+00> : vector<8x32xf32>
      %134 = tpu.matmul %127, %133, %cst_69 {dimension_numbers = #tpu.dot_dimension_numbers<[1], [0], [0], [1], [0, 0, 1, 1], [], []>} : vector<8x32xbf16>, vector<32x32xbf16>, vector<8x32xf32> -> vector<8x32xf32>
      %c0_70 = arith.constant 0 : index
      %c0_71 = arith.constant 0 : index
      %135 = vector.load %arg8[%c0_70, %c0_71] : memref<1x32xf32, #tpu.memory_space<vmem>>, vector<1x32xf32>
      %136 = vector.broadcast %135 : vector<1x32xf32> to vector<8x32xf32>
      %137 = arith.addf %134, %136 : vector<8x32xf32>
      %138 = arith.truncf %132 : vector<8x32xf32> to vector<8x32xbf16>
      %c0_72 = arith.constant 0 : index
      %c0_73 = arith.constant 0 : index
      %139 = vector.load %arg13[%c0_72, %c0_73] : memref<8x32xbf16, #tpu.memory_space<vmem>>, vector<8x32xbf16>
      tpu.vector_store %arg13[%c0_72, %c0_73], %138 {strides = array<i32>} : memref<8x32xbf16, #tpu.memory_space<vmem>>, vector<8x32xbf16>,
      %140 = arith.truncf %137 : vector<8x32xf32> to vector<8x32xbf16>
      %c0_74 = arith.constant 0 : index
      %c0_75 = arith.constant 0 : index
      %141 = vector.load %arg14[%c0_74, %c0_75] : memref<8x32xbf16, #tpu.memory_space<vmem>>, vector<8x32xbf16>
      tpu.vector_store %arg14[%c0_74, %c0_75], %140 {strides = array<i32>} : memref<8x32xbf16, #tpu.memory_space<vmem>>, vector<8x32xbf16>,
    } else {
    }
    %c8_i32 = arith.constant 8 : i32
    %3 = arith.muli %arg1, %c8_i32 : i32
    %4 = tpu.assume_multiple %3, 8 : i32
    %c0 = arith.constant 0 : index
    %5 = arith.index_cast %4 : i32 to index
    %c0_1 = arith.constant 0 : index
    %6 = vector.load %arg2[%c0, %5, %c0_1] : memref<1x8x32xf32, #tpu.memory_space<vmem>>, vector<1x8x32xf32>
    %7 = vector.shape_cast %6 : vector<1x8x32xf32> to vector<8x32xf32>
    %8 = arith.truncf %7 : vector<8x32xf32> to vector<8x32xbf16>
    %c0_2 = arith.constant 0 : index
    %c0_3 = arith.constant 0 : index
    %9 = vector.load %arg3[%c0_2, %c0_3] : memref<32x32xbf16, #tpu.memory_space<vmem>>, vector<32x32xbf16>
    %cst = arith.constant dense<0.000000e+00> : vector<8x32xf32>
    %10 = tpu.matmul %8, %9, %cst {dimension_numbers = #tpu.dot_dimension_numbers<[1], [0], [0], [1], [0, 0, 1, 1], [], []>} : vector<8x32xbf16>, vector<32x32xbf16>, vector<8x32xf32> -> vector<8x32xf32>
    %c0_4 = arith.constant 0 : index
    %c0_5 = arith.constant 0 : index
    %11 = vector.load %arg4[%c0_4, %c0_5] : memref<1x32xf32, #tpu.memory_space<vmem>>, vector<1x32xf32>
    %12 = vector.broadcast %11 : vector<1x32xf32> to vector<8x32xf32>
    %13 = arith.addf %10, %12 : vector<8x32xf32>
    %cst_6 = arith.constant 0.353553385 : f32
    %14 = vector.broadcast %cst_6 : f32 to vector<8x32xf32>
    %15 = arith.mulf %13, %14 : vector<8x32xf32>
    %16 = arith.truncf %15 : vector<8x32xf32> to vector<8x32xbf16>
    %c0_7 = arith.constant 0 : index
    %c0_8 = arith.constant 0 : index
    %17 = vector.load %arg13[%c0_7, %c0_8] : memref<8x32xbf16, #tpu.memory_space<vmem>>, vector<8x32xbf16>
    %c0_9 = arith.constant 0 : index
    %c0_10 = arith.constant 0 : index
    %18 = vector.load %arg14[%c0_9, %c0_10] : memref<8x32xbf16, #tpu.memory_space<vmem>>, vector<8x32xbf16>
    %19 = tpu.iota {dimensions = array<i32: 0>} : vector<8x8xi32>
    %20 = vector.broadcast %4 : i32 to vector<8x8xi32>
    %21 = arith.addi %19, %20 : vector<8x8xi32>
    %22 = tpu.iota {dimensions = array<i32: 1>} : vector<8x8xi32>
    %23 = arith.cmpi sle, %22, %21 : vector<8x8xi32>
    %24 = vector.extract_strided_slice %16 {offsets = [0, 0], sizes = [8, 8], strides = [1, 1]} : vector<8x32xbf16> to vector<8x8xbf16>
    %25 = vector.extract_strided_slice %17 {offsets = [0, 0], sizes = [8, 8], strides = [1, 1]} : vector<8x32xbf16> to vector<8x8xbf16>
    %cst_11 = arith.constant dense<0.000000e+00> : vector<8x8xf32>
    %26 = tpu.matmul %24, %25, %cst_11 {dimension_numbers = #tpu.dot_dimension_numbers<[1], [1], [0], [0], [0, 0, 1, 0], [], []>} : vector<8x8xbf16>, vector<8x8xbf16>, vector<8x8xf32> -> vector<8x8xf32>
    %cst_12 = arith.constant 0xFF800000 : f32
    %27 = vector.broadcast %cst_12 : f32 to vector<8x8xf32>
    %28 = arith.select %23, %26, %27 : vector<8x8xi1>, vector<8x8xf32>
    %cst_13 = arith.constant dense<0xFF800000> : vector<8xf32>
    %29 = vector.multi_reduction <maximumf>, %28, %cst_13 [1] : vector<8x8xf32> to vector<8xf32>
    %30 = vector.shape_cast %29 : vector<8xf32> to vector<8x1xf32>
    %31 = vector.broadcast %30 : vector<8x1xf32> to vector<8x8xf32>
    %32 = arith.subf %28, %31 : vector<8x8xf32>
    %33 = math.exp %32 : vector<8x8xf32>
    %cst_14 = arith.constant dense<0.000000e+00> : vector<8xf32>
    %34 = vector.multi_reduction <add>, %33, %cst_14 [1] : vector<8x8xf32> to vector<8xf32>
    %35 = vector.shape_cast %34 : vector<8xf32> to vector<8x1xf32>
    %36 = tpu.reciprocal %35 {approx = true} : vector<8x1xf32> -> vector<8x1xf32>
    %37 = vector.broadcast %36 : vector<8x1xf32> to vector<8x8xf32>
    %38 = arith.mulf %33, %37 : vector<8x8xf32>
    %c0_15 = arith.constant 0 : index
    %c0_16 = arith.constant 0 : index
    %c0_17 = arith.constant 0 : index
    %c0_18 = arith.constant 0 : index
    %39 = vector.load %arg12[%c0_15, %c0_16, %c0_17, %c0_18] : memref<1x4x8x8xf32, #tpu.memory_space<vmem>>, vector<1x1x8x8xf32>
    %40 = vector.shape_cast %39 : vector<1x1x8x8xf32> to vector<8x8xf32>
    %41 = vector.shape_cast %38 : vector<8x8xf32> to vector<1x1x8x8xf32>
    tpu.vector_store %arg12[%c0_15, %c0_16, %c0_17, %c0_18], %41 {strides = array<i32>} : memref<1x4x8x8xf32, #tpu.memory_space<vmem>>, vector<1x1x8x8xf32>,
    %42 = arith.truncf %38 : vector<8x8xf32> to vector<8x8xbf16>
    %43 = vector.extract_strided_slice %18 {offsets = [0, 0], sizes = [8, 8], strides = [1, 1]} : vector<8x32xbf16> to vector<8x8xbf16>
    %cst_19 = arith.constant dense<0.000000e+00> : vector<8x8xf32>
    %44 = tpu.matmul %42, %43, %cst_19 {dimension_numbers = #tpu.dot_dimension_numbers<[1], [0], [0], [1], [0, 0, 1, 1], [], []>} : vector<8x8xbf16>, vector<8x8xbf16>, vector<8x8xf32> -> vector<8x8xf32>
    %45 = arith.truncf %44 : vector<8x8xf32> to vector<8x8xbf16>
    %c0_20 = arith.constant 0 : index
    %c0_21 = arith.constant 0 : index
    %46 = vector.load %arg15[%c0_20, %c0_21] : memref<8x32xbf16, #tpu.memory_space<vmem>>, vector<8x8xbf16>
    tpu.vector_store %arg15[%c0_20, %c0_21], %45 {strides = array<i32>} : memref<8x32xbf16, #tpu.memory_space<vmem>>, vector<8x8xbf16>,
    %47 = vector.extract_strided_slice %16 {offsets = [0, 8], sizes = [8, 8], strides = [1, 1]} : vector<8x32xbf16> to vector<8x8xbf16>
    %48 = vector.extract_strided_slice %17 {offsets = [0, 8], sizes = [8, 8], strides = [1, 1]} : vector<8x32xbf16> to vector<8x8xbf16>
    %cst_22 = arith.constant dense<0.000000e+00> : vector<8x8xf32>
    %49 = tpu.matmul %47, %48, %cst_22 {dimension_numbers = #tpu.dot_dimension_numbers<[1], [1], [0], [0], [0, 0, 1, 0], [], []>} : vector<8x8xbf16>, vector<8x8xbf16>, vector<8x8xf32> -> vector<8x8xf32>
    %cst_23 = arith.constant 0xFF800000 : f32
    %50 = vector.broadcast %cst_23 : f32 to vector<8x8xf32>
    %51 = arith.select %23, %49, %50 : vector<8x8xi1>, vector<8x8xf32>
    %cst_24 = arith.constant dense<0xFF800000> : vector<8xf32>
    %52 = vector.multi_reduction <maximumf>, %51, %cst_24 [1] : vector<8x8xf32> to vector<8xf32>
    %53 = vector.shape_cast %52 : vector<8xf32> to vector<8x1xf32>
    %54 = vector.broadcast %53 : vector<8x1xf32> to vector<8x8xf32>
    %55 = arith.subf %51, %54 : vector<8x8xf32>
    %56 = math.exp %55 : vector<8x8xf32>
    %cst_25 = arith.constant dense<0.000000e+00> : vector<8xf32>
    %57 = vector.multi_reduction <add>, %56, %cst_25 [1] : vector<8x8xf32> to vector<8xf32>
    %58 = vector.shape_cast %57 : vector<8xf32> to vector<8x1xf32>
    %59 = tpu.reciprocal %58 {approx = true} : vector<8x1xf32> -> vector<8x1xf32>
    %60 = vector.broadcast %59 : vector<8x1xf32> to vector<8x8xf32>
    %61 = arith.mulf %56, %60 : vector<8x8xf32>
    %c0_26 = arith.constant 0 : index
    %c1 = arith.constant 1 : index
    %c0_27 = arith.constant 0 : index
    %c0_28 = arith.constant 0 : index
    %62 = vector.load %arg12[%c0_26, %c1, %c0_27, %c0_28] : memref<1x4x8x8xf32, #tpu.memory_space<vmem>>, vector<1x1x8x8xf32>
    %63 = vector.shape_cast %62 : vector<1x1x8x8xf32> to vector<8x8xf32>
    %64 = vector.shape_cast %61 : vector<8x8xf32> to vector<1x1x8x8xf32>
    tpu.vector_store %arg12[%c0_26, %c1, %c0_27, %c0_28], %64 {strides = array<i32>} : memref<1x4x8x8xf32, #tpu.memory_space<vmem>>, vector<1x1x8x8xf32>,
    %65 = arith.truncf %61 : vector<8x8xf32> to vector<8x8xbf16>
    %66 = vector.extract_strided_slice %18 {offsets = [0, 8], sizes = [8, 8], strides = [1, 1]} : vector<8x32xbf16> to vector<8x8xbf16>
    %cst_29 = arith.constant dense<0.000000e+00> : vector<8x8xf32>
    %67 = tpu.matmul %65, %66, %cst_29 {dimension_numbers = #tpu.dot_dimension_numbers<[1], [0], [0], [1], [0, 0, 1, 1], [], []>} : vector<8x8xbf16>, vector<8x8xbf16>, vector<8x8xf32> -> vector<8x8xf32>
    %68 = arith.truncf %67 : vector<8x8xf32> to vector<8x8xbf16>
    %c0_30 = arith.constant 0 : index
    %c8 = arith.constant 8 : index
    %69 = vector.load %arg15[%c0_30, %c8] : memref<8x32xbf16, #tpu.memory_space<vmem>>, vector<8x8xbf16>
    tpu.vector_store %arg15[%c0_30, %c8], %68 {strides = array<i32>} : memref<8x32xbf16, #tpu.memory_space<vmem>>, vector<8x8xbf16>,
    %70 = vector.extract_strided_slice %16 {offsets = [0, 16], sizes = [8, 8], strides = [1, 1]} : vector<8x32xbf16> to vector<8x8xbf16>
    %71 = vector.extract_strided_slice %17 {offsets = [0, 16], sizes = [8, 8], strides = [1, 1]} : vector<8x32xbf16> to vector<8x8xbf16>
    %cst_31 = arith.constant dense<0.000000e+00> : vector<8x8xf32>
    %72 = tpu.matmul %70, %71, %cst_31 {dimension_numbers = #tpu.dot_dimension_numbers<[1], [1], [0], [0], [0, 0, 1, 0], [], []>} : vector<8x8xbf16>, vector<8x8xbf16>, vector<8x8xf32> -> vector<8x8xf32>
    %cst_32 = arith.constant 0xFF800000 : f32
    %73 = vector.broadcast %cst_32 : f32 to vector<8x8xf32>
    %74 = arith.select %23, %72, %73 : vector<8x8xi1>, vector<8x8xf32>
    %cst_33 = arith.constant dense<0xFF800000> : vector<8xf32>
    %75 = vector.multi_reduction <maximumf>, %74, %cst_33 [1] : vector<8x8xf32> to vector<8xf32>
    %76 = vector.shape_cast %75 : vector<8xf32> to vector<8x1xf32>
    %77 = vector.broadcast %76 : vector<8x1xf32> to vector<8x8xf32>
    %78 = arith.subf %74, %77 : vector<8x8xf32>
    %79 = math.exp %78 : vector<8x8xf32>
    %cst_34 = arith.constant dense<0.000000e+00> : vector<8xf32>
    %80 = vector.multi_reduction <add>, %79, %cst_34 [1] : vector<8x8xf32> to vector<8xf32>
    %81 = vector.shape_cast %80 : vector<8xf32> to vector<8x1xf32>
    %82 = tpu.reciprocal %81 {approx = true} : vector<8x1xf32> -> vector<8x1xf32>
    %83 = vector.broadcast %82 : vector<8x1xf32> to vector<8x8xf32>
    %84 = arith.mulf %79, %83 : vector<8x8xf32>
    %c0_35 = arith.constant 0 : index
    %c2 = arith.constant 2 : index
    %c0_36 = arith.constant 0 : index
    %c0_37 = arith.constant 0 : index
    %85 = vector.load %arg12[%c0_35, %c2, %c0_36, %c0_37] : memref<1x4x8x8xf32, #tpu.memory_space<vmem>>, vector<1x1x8x8xf32>
    %86 = vector.shape_cast %85 : vector<1x1x8x8xf32> to vector<8x8xf32>
    %87 = vector.shape_cast %84 : vector<8x8xf32> to vector<1x1x8x8xf32>
    tpu.vector_store %arg12[%c0_35, %c2, %c0_36, %c0_37], %87 {strides = array<i32>} : memref<1x4x8x8xf32, #tpu.memory_space<vmem>>, vector<1x1x8x8xf32>,
    %88 = arith.truncf %84 : vector<8x8xf32> to vector<8x8xbf16>
    %89 = vector.extract_strided_slice %18 {offsets = [0, 16], sizes = [8, 8], strides = [1, 1]} : vector<8x32xbf16> to vector<8x8xbf16>
    %cst_38 = arith.constant dense<0.000000e+00> : vector<8x8xf32>
    %90 = tpu.matmul %88, %89, %cst_38 {dimension_numbers = #tpu.dot_dimension_numbers<[1], [0], [0], [1], [0, 0, 1, 1], [], []>} : vector<8x8xbf16>, vector<8x8xbf16>, vector<8x8xf32> -> vector<8x8xf32>
    %91 = arith.truncf %90 : vector<8x8xf32> to vector<8x8xbf16>
    %c0_39 = arith.constant 0 : index
    %c16 = arith.constant 16 : index
    %92 = vector.load %arg15[%c0_39, %c16] : memref<8x32xbf16, #tpu.memory_space<vmem>>, vector<8x8xbf16>
    tpu.vector_store %arg15[%c0_39, %c16], %91 {strides = array<i32>} : memref<8x32xbf16, #tpu.memory_space<vmem>>, vector<8x8xbf16>,
    %93 = vector.extract_strided_slice %16 {offsets = [0, 24], sizes = [8, 8], strides = [1, 1]} : vector<8x32xbf16> to vector<8x8xbf16>
    %94 = vector.extract_strided_slice %17 {offsets = [0, 24], sizes = [8, 8], strides = [1, 1]} : vector<8x32xbf16> to vector<8x8xbf16>
    %cst_40 = arith.constant dense<0.000000e+00> : vector<8x8xf32>
    %95 = tpu.matmul %93, %94, %cst_40 {dimension_numbers = #tpu.dot_dimension_numbers<[1], [1], [0], [0], [0, 0, 1, 0], [], []>} : vector<8x8xbf16>, vector<8x8xbf16>, vector<8x8xf32> -> vector<8x8xf32>
    %cst_41 = arith.constant 0xFF800000 : f32
    %96 = vector.broadcast %cst_41 : f32 to vector<8x8xf32>
    %97 = arith.select %23, %95, %96 : vector<8x8xi1>, vector<8x8xf32>
    %cst_42 = arith.constant dense<0xFF800000> : vector<8xf32>
    %98 = vector.multi_reduction <maximumf>, %97, %cst_42 [1] : vector<8x8xf32> to vector<8xf32>
    %99 = vector.shape_cast %98 : vector<8xf32> to vector<8x1xf32>
    %100 = vector.broadcast %99 : vector<8x1xf32> to vector<8x8xf32>
    %101 = arith.subf %97, %100 : vector<8x8xf32>
    %102 = math.exp %101 : vector<8x8xf32>
    %cst_43 = arith.constant dense<0.000000e+00> : vector<8xf32>
    %103 = vector.multi_reduction <add>, %102, %cst_43 [1] : vector<8x8xf32> to vector<8xf32>
    %104 = vector.shape_cast %103 : vector<8xf32> to vector<8x1xf32>
    %105 = tpu.reciprocal %104 {approx = true} : vector<8x1xf32> -> vector<8x1xf32>
    %106 = vector.broadcast %105 : vector<8x1xf32> to vector<8x8xf32>
    %107 = arith.mulf %102, %106 : vector<8x8xf32>
    %c0_44 = arith.constant 0 : index
    %c3 = arith.constant 3 : index
    %c0_45 = arith.constant 0 : index
    %c0_46 = arith.constant 0 : index
    %108 = vector.load %arg12[%c0_44, %c3, %c0_45, %c0_46] : memref<1x4x8x8xf32, #tpu.memory_space<vmem>>, vector<1x1x8x8xf32>
    %109 = vector.shape_cast %108 : vector<1x1x8x8xf32> to vector<8x8xf32>
    %110 = vector.shape_cast %107 : vector<8x8xf32> to vector<1x1x8x8xf32>
    tpu.vector_store %arg12[%c0_44, %c3, %c0_45, %c0_46], %110 {strides = array<i32>} : memref<1x4x8x8xf32, #tpu.memory_space<vmem>>, vector<1x1x8x8xf32>,
    %111 = arith.truncf %107 : vector<8x8xf32> to vector<8x8xbf16>
    %112 = vector.extract_strided_slice %18 {offsets = [0, 24], sizes = [8, 8], strides = [1, 1]} : vector<8x32xbf16> to vector<8x8xbf16>
    %cst_47 = arith.constant dense<0.000000e+00> : vector<8x8xf32>
    %113 = tpu.matmul %111, %112, %cst_47 {dimension_numbers = #tpu.dot_dimension_numbers<[1], [0], [0], [1], [0, 0, 1, 1], [], []>} : vector<8x8xbf16>, vector<8x8xbf16>, vector<8x8xf32> -> vector<8x8xf32>
    %114 = arith.truncf %113 : vector<8x8xf32> to vector<8x8xbf16>
    %c0_48 = arith.constant 0 : index
    %c24 = arith.constant 24 : index
    %115 = vector.load %arg15[%c0_48, %c24] : memref<8x32xbf16, #tpu.memory_space<vmem>>, vector<8x8xbf16>
    tpu.vector_store %arg15[%c0_48, %c24], %114 {strides = array<i32>} : memref<8x32xbf16, #tpu.memory_space<vmem>>, vector<8x8xbf16>,
    %c0_49 = arith.constant 0 : index
    %c0_50 = arith.constant 0 : index
    %116 = vector.load %arg15[%c0_49, %c0_50] : memref<8x32xbf16, #tpu.memory_space<vmem>>, vector<8x32xbf16>
    %c0_51 = arith.constant 0 : index
    %c0_52 = arith.constant 0 : index
    %117 = vector.load %arg9[%c0_51, %c0_52] : memref<32x32xbf16, #tpu.memory_space<vmem>>, vector<32x32xbf16>
    %cst_53 = arith.constant dense<0.000000e+00> : vector<8x32xf32>
    %118 = tpu.matmul %116, %117, %cst_53 {dimension_numbers = #tpu.dot_dimension_numbers<[1], [0], [0], [1], [0, 0, 1, 1], [], []>} : vector<8x32xbf16>, vector<32x32xbf16>, vector<8x32xf32> -> vector<8x32xf32>
    %c0_54 = arith.constant 0 : index
    %c0_55 = arith.constant 0 : index
    %119 = vector.load %arg10[%c0_54, %c0_55] : memref<1x32xf32, #tpu.memory_space<vmem>>, vector<1x32xf32>
    %120 = vector.broadcast %119 : vector<1x32xf32> to vector<8x32xf32>
    %121 = arith.addf %118, %120 : vector<8x32xf32>
    %c0_56 = arith.constant 0 : index
    %c0_57 = arith.constant 0 : index
    %c0_58 = arith.constant 0 : index
    %122 = vector.load %arg11[%c0_56, %c0_57, %c0_58] : memref<1x8x32xf32, #tpu.memory_space<vmem>>, vector<1x8x32xf32>
    %123 = vector.shape_cast %122 : vector<1x8x32xf32> to vector<8x32xf32>
    %124 = vector.shape_cast %121 : vector<8x32xf32> to vector<1x8x32xf32>
    tpu.vector_store %arg11[%c0_56, %c0_57, %c0_58], %124 {strides = array<i32>} : memref<1x8x32xf32, #tpu.memory_space<vmem>>, vector<1x8x32xf32>,
    return
  }
  func.func @transform_0(%arg0: i32, %arg1: i32) -> (i32, i32, i32) {
    %c0_i32 = arith.constant 0 : i32
    %c0_i32_0 = arith.constant 0 : i32
    %c0_i32_1 = arith.constant 0 : i32
    return %arg0, %c0_i32, %c0_i32_0 : i32, i32, i32
  }
  func.func @transform_1(%arg0: i32, %arg1: i32) -> (i32, i32) {
    %c0_i32 = arith.constant 0 : i32
    %c0_i32_0 = arith.constant 0 : i32
    %c0_i32_1 = arith.constant 0 : i32
    return %c0_i32, %c0_i32_0 : i32, i32
  }
  func.func @transform_2(%arg0: i32, %arg1: i32) -> (i32, i32) {
    %c0_i32 = arith.constant 0 : i32
    %c0_i32_0 = arith.constant 0 : i32
    %c0_i32_1 = arith.constant 0 : i32
    return %c0_i32, %c0_i32_0 : i32, i32
  }
  func.func @transform_3(%arg0: i32, %arg1: i32) -> (i32, i32) {
    %c0_i32 = arith.constant 0 : i32
    %c0_i32_0 = arith.constant 0 : i32
    %c0_i32_1 = arith.constant 0 : i32
    return %c0_i32, %c0_i32_0 : i32, i32
  }
  func.func @transform_4(%arg0: i32, %arg1: i32) -> (i32, i32) {
    %c0_i32 = arith.constant 0 : i32
    %c0_i32_0 = arith.constant 0 : i32
    %c0_i32_1 = arith.constant 0 : i32
    return %c0_i32, %c0_i32_0 : i32, i32
  }
  func.func @transform_5(%arg0: i32, %arg1: i32) -> (i32, i32) {
    %c0_i32 = arith.constant 0 : i32
    %c0_i32_0 = arith.constant 0 : i32
    %c0_i32_1 = arith.constant 0 : i32
    return %c0_i32, %c0_i32_0 : i32, i32
  }
  func.func @transform_6(%arg0: i32, %arg1: i32) -> (i32, i32) {
    %c0_i32 = arith.constant 0 : i32
    %c0_i32_0 = arith.constant 0 : i32
    %c0_i32_1 = arith.constant 0 : i32
    return %c0_i32, %c0_i32_0 : i32, i32
  }
  func.func @transform_7(%arg0: i32, %arg1: i32) -> (i32, i32) {
    %c0_i32 = arith.constant 0 : i32
    %c0_i32_0 = arith.constant 0 : i32
    %c0_i32_1 = arith.constant 0 : i32
    return %c0_i32, %c0_i32_0 : i32, i32
  }
  func.func @transform_8(%arg0: i32, %arg1: i32) -> (i32, i32) {
    %c0_i32 = arith.constant 0 : i32
    %c0_i32_0 = arith.constant 0 : i32
    %c0_i32_1 = arith.constant 0 : i32
    return %c0_i32, %c0_i32_0 : i32, i32
  }
  func.func @transform_9(%arg0: i32, %arg1: i32) -> (i32, i32, i32) {
    %c0_i32 = arith.constant 0 : i32
    %c0_i32_0 = arith.constant 0 : i32
    return %arg0, %arg1, %c0_i32 : i32, i32, i32
  }
  func.func @transform_10(%arg0: i32, %arg1: i32) -> (i32, i32, i32, i32) {
    %c0_i32 = arith.constant 0 : i32
    %c0_i32_0 = arith.constant 0 : i32
    %c0_i32_1 = arith.constant 0 : i32
    return %arg0, %c0_i32, %arg1, %c0_i32_0 : i32, i32, i32, i32
  }
}

</mosaic_0001>

<llo_original>
// kernel: tpu_custom_call.1
$region0: #{tpu_custom_call.1}
  #allocation0 [shape = 'u32[]', space=smem, size = 0x4, offset = 0x4, fixed_abs, tag = 'smem constant byte address 0x4 - core index']
  #allocation1 [shape = 'u32[144,128]{1,0:T(1,128)}', space=vmem, size = 0x12000, scoped, tag = 'internal scratch']
  #allocation2 [shape = 'bf16[8,32]{1,0:T(8,128)(2,1)}', space=vmem, size = 0x800, scoped, tag = 'scratch operand']
  #allocation3 [shape = 'bf16[8,32]{1,0:T(8,128)(2,1)}', space=vmem, size = 0x800, scoped, tag = 'scratch operand']
  #allocation4 [shape = 'bf16[8,32]{1,0:T(8,128)(2,1)}', space=vmem, size = 0x800, scoped, tag = 'scratch operand']
  %s0 = inlined_call_operand.hbm [shape: f32[2,8,32], index: 0, kind: input, shape index: {}]
  %s1 = inlined_call_operand.hbm [shape: bf16[32,32], index: 1, kind: input, shape index: {}]
  %s2 = inlined_call_operand.vmem [shape: f32[1,32], index: 2, kind: input, shape index: {}]
  %s3 = inlined_call_operand.hbm [shape: bf16[32,32], index: 3, kind: input, shape index: {}]
  %s4 = inlined_call_operand.vmem [shape: f32[1,32], index: 4, kind: input, shape index: {}]
  %s5 = inlined_call_operand.vmem [shape: bf16[32,32], index: 5, kind: input, shape index: {}]
  %s6 = inlined_call_operand.vmem [shape: f32[1,32], index: 6, kind: input, shape index: {}]
  %s7 = inlined_call_operand.hbm [shape: bf16[32,32], index: 7, kind: input, shape index: {}]
  %s8 = inlined_call_operand.vmem [shape: f32[1,32], index: 8, kind: input, shape index: {}]
  %s9 = inlined_call_operand.hbm [shape: f32[2,8,32], index: 9, kind: output, shape index: {0}]
  %s10 = inlined_call_operand.hbm [shape: f32[2,4,8,8], index: 10, kind: output, shape index: {1}]
  %11 = xla_tuple %s9, %s10
  %s12 = sld [smem:[#allocation0]]
  $region97: #{tpu_custom_call.1} parent=0
    _
  %s14 = ssub.s32 1, %s12
  %s15 = scalar_select 0, %s14, %s12
  $region1: #{tpu_custom_call.1} parent=0
    #allocation5 [shape = 'u8[8192]{0}', space=vmem, size = 0x2000, scoped, tag = 'input window, operand 0']
    #allocation6 [shape = 's32[2]{0}', space=sflag, size = 0x8, scoped, tag = 'scoped memory for tpu_custom_call.1']
    #allocation7 [shape = 's32[2]{0}', space=sflag, size = 0x8, scoped, tag = 'scoped memory for tpu_custom_call.1']
    #allocation8 [shape = 'u8[8192]{0}', space=vmem, size = 0x2000, scoped, tag = 'input window, operand 1, single buffered']
    #allocation9 [shape = 's32[1]{0}', space=sflag, size = 0x4, scoped, tag = 'scoped memory for tpu_custom_call.1']
    #allocation10 [shape = 'u8[8192]{0}', space=vmem, size = 0x2000, scoped, tag = 'input window, operand 3, single buffered']
    #allocation11 [shape = 'u8[8192]{0}', space=vmem, size = 0x2000, scoped, tag = 'input window, operand 7, single buffered']
    #allocation12 [shape = 's32[1]{0}', space=sflag, size = 0x4, scoped, tag = 'scoped memory for tpu_custom_call.1']
    #allocation13 [shape = 'u8[8192]{0}', space=vmem, size = 0x2000, scoped, tag = 'output window, operand 0']
    #allocation14 [shape = 'u8[32768]{0}', space=vmem, size = 0x8000, scoped, tag = 'output window, operand 1']
    #allocation15 [shape = 's32[2]{0}', space=sflag, size = 0x8, scoped, tag = 'scoped memory for tpu_custom_call.1']
    %16 = vsyncpa [#allocation6], 0
    %s17 = scalar_lea.sflag [#allocation6], 1
    %18 = vsyncpa %s17, 0
    %19 = vsyncpa [#allocation9], 0
    %20 = vsyncpa [#allocation12], 0
    %21 = vsyncpa [#allocation7], 0
    %s22 = scalar_lea.sflag [#allocation7], 1
    %23 = vsyncpa %s22, 0
    %24 = vsyncpa [#allocation15], 0
    %s25 = scalar_lea.sflag [#allocation15], 1
    %26 = vsyncpa %s25, 0
    loop: start=0, step=1, limit=4
    $region2: #{tpu_custom_call.1} parent=1 // loop_pre_header
      _
    $region3: #{tpu_custom_call.1} parent=1 // loop_header
      %s28 = sphi 0, %s32
      %p29 = scmp.ge.s32.totalorder %s28, 4
      %s35 = sphi 0, %s47
      %s36 = sphi 0, %s43
      %s37 = sphi 0, %s35
      %s38 = sphi 0, %s36
      %s39 = sphi 0, %s37
      %s40 = sphi 0, %s38
      %s50 = sphi 0, %s52
      %s53 = sphi 0, %s50
      %s54 = sphi 0, %s53
      %s70 = sphi 0, %s54
      %s74 = sphi 0, %s74
      %s76 = sphi 0, %s74
      %s77 = sphi 0, %s76
      %s91 = sphi 0, %s77
      %s95 = sphi 0, %s95
      %s97 = sphi 0, %s95
      %s98 = sphi 0, %s97
      %s112 = sphi 0, %s98
      %s116 = sphi 0, %s116
      %s118 = sphi 0, %s116
      %s119 = sphi 0, %s118
      %s133 = sphi 0, %s119
      %s137 = sphi 0, %s137
      %s139 = sphi 0, %s137
      %s140 = sphi 0, %s139
      %s154 = sphi 0, %s140
      %s158 = sphi 0, %s158
      %s160 = sphi 0, %s158
      %s161 = sphi 0, %s160
      %s175 = sphi 0, %s161
      %s179 = sphi 0, %s179
      %s181 = sphi 0, %s179
      %s182 = sphi 0, %s181
      %s196 = sphi 0, %s182
      %s200 = sphi 0, %s200
      %s202 = sphi 0, %s200
      %s203 = sphi 0, %s202
      %s217 = sphi 0, %s203
      %s221 = sphi 0, %s221
      %s223 = sphi 0, %s221
      %s224 = sphi 0, %s223
      %s238 = sphi 0, %s224
      %s246 = sphi 0, %s248
      %s249 = sphi 0, %s246
      %s250 = sphi 0, %s249
      %s266 = sphi 0, %s250
      %s274 = sphi 0, %s276
      %s277 = sphi 0, %s274
      %s278 = sphi 0, %s277
      %s294 = sphi 0, %s278
    $region4: #{tpu_custom_call.1} parent=1 // loop_header_branch
      %31 = sbr.rel (%p29) target = $region8
    $region5: #{tpu_custom_call.1} parent=1 // loop_body
      %s33 = ssub.s32 %s28, 1
      %s34 = ssub.s32 %s28, 2
      %s41 = sadd.s32 1, %s36
      %p42 = scmp.ge.s32.totalorder %s41, 1
      %s43 = scalar_select %p42, 0, %s41
      %s44 = sadd.s32 1, %s35
      %s45 = scalar_select %p42, %s44, %s35
      %p46 = scmp.ge.s32.totalorder %s45, 2
      %s47 = scalar_select %p46, 0, %s45
      %s48 = ssub.s32 %s35, %s47
      %p49 = scmp.eq.s32.totalorder %s48, 0
      %s51 = sadd.s32 %s50, 1
      %s52 = scalar_select %p49, %s50, %s51
      %p55 = pneg %p49
      %p56 = scmp.eq.s32.totalorder %s28, 1
      %p57 = por %p55, %p56
      %p58 = scmp.ne.s32.totalorder %s50, %s53
      %p59 = scmp.eq.s32.totalorder %s28, 0
      %p60 = por %p58, %p59
      %p61 = scmp.ne.s32.totalorder %s50, %s53
      %p62 = scmp.eq.s32.totalorder %s33, 1
      %p63 = por %p61, %p62
      %p64 = scmp.ne.s32.totalorder %s53, %s54
      %p65 = scmp.eq.s32.totalorder %s33, 0
      %p66 = por %p64, %p65
      %p67 = scmp.ne.s32.totalorder %s53, %s54
      %p68 = scmp.eq.s32.totalorder %s34, 1
      %p69 = por %p67, %p68
      %p71 = scmp.ne.s32.totalorder %s54, %s70
      %p72 = scmp.eq.s32.totalorder %s34, 0
      %p73 = por %p71, %p72
      %s75 = sadd.s32 %s74, 1
      %p78 = scmp.eq.s32.totalorder %s28, 1
      %p79 = scmp.ne.s32.totalorder %s74, %s76
      %p80 = scmp.eq.s32.totalorder %s28, 0
      %p81 = por %p79, %p80
      %p82 = scmp.ne.s32.totalorder %s74, %s76
      %p83 = scmp.eq.s32.totalorder %s33, 1
      %p84 = por %p82, %p83
      %p85 = scmp.ne.s32.totalorder %s76, %s77
      %p86 = scmp.eq.s32.totalorder %s33, 0
      %p87 = por %p85, %p86
      %p88 = scmp.ne.s32.totalorder %s76, %s77
      %p89 = scmp.eq.s32.totalorder %s34, 1
      %p90 = por %p88, %p89
      %p92 = scmp.ne.s32.totalorder %s77, %s91
      %p93 = scmp.eq.s32.totalorder %s34, 0
      %p94 = por %p92, %p93
      %s96 = sadd.s32 %s95, 1
      %p99 = scmp.eq.s32.totalorder %s28, 1
      %p100 = scmp.ne.s32.totalorder %s95, %s97
      %p101 = scmp.eq.s32.totalorder %s28, 0
      %p102 = por %p100, %p101
      %p103 = scmp.ne.s32.totalorder %s95, %s97
      %p104 = scmp.eq.s32.totalorder %s33, 1
      %p105 = por %p103, %p104
      %p106 = scmp.ne.s32.totalorder %s97, %s98
      %p107 = scmp.eq.s32.totalorder %s33, 0
      %p108 = por %p106, %p107
      %p109 = scmp.ne.s32.totalorder %s97, %s98
      %p110 = scmp.eq.s32.totalorder %s34, 1
      %p111 = por %p109, %p110
      %p113 = scmp.ne.s32.totalorder %s98, %s112
      %p114 = scmp.eq.s32.totalorder %s34, 0
      %p115 = por %p113, %p114
      %s117 = sadd.s32 %s116, 1
      %p120 = scmp.eq.s32.totalorder %s28, 1
      %p121 = scmp.ne.s32.totalorder %s116, %s118
      %p122 = scmp.eq.s32.totalorder %s28, 0
      %p123 = por %p121, %p122
      %p124 = scmp.ne.s32.totalorder %s116, %s118
      %p125 = scmp.eq.s32.totalorder %s33, 1
      %p126 = por %p124, %p125
      %p127 = scmp.ne.s32.totalorder %s118, %s119
      %p128 = scmp.eq.s32.totalorder %s33, 0
      %p129 = por %p127, %p128
      %p130 = scmp.ne.s32.totalorder %s118, %s119
      %p131 = scmp.eq.s32.totalorder %s34, 1
      %p132 = por %p130, %p131
      %p134 = scmp.ne.s32.totalorder %s119, %s133
      %p135 = scmp.eq.s32.totalorder %s34, 0
      %p136 = por %p134, %p135
      %s138 = sadd.s32 %s137, 1
      %p141 = scmp.eq.s32.totalorder %s28, 1
      %p142 = scmp.ne.s32.totalorder %s137, %s139
      %p143 = scmp.eq.s32.totalorder %s28, 0
      %p144 = por %p142, %p143
      %p145 = scmp.ne.s32.totalorder %s137, %s139
      %p146 = scmp.eq.s32.totalorder %s33, 1
      %p147 = por %p145, %p146
      %p148 = scmp.ne.s32.totalorder %s139, %s140
      %p149 = scmp.eq.s32.totalorder %s33, 0
      %p150 = por %p148, %p149
      %p151 = scmp.ne.s32.totalorder %s139, %s140
      %p152 = scmp.eq.s32.totalorder %s34, 1
      %p153 = por %p151, %p152
      %p155 = scmp.ne.s32.totalorder %s140, %s154
      %p156 = scmp.eq.s32.totalorder %s34, 0
      %p157 = por %p155, %p156
      %s159 = sadd.s32 %s158, 1
      %p162 = scmp.eq.s32.totalorder %s28, 1
      %p163 = scmp.ne.s32.totalorder %s158, %s160
      %p164 = scmp.eq.s32.totalorder %s28, 0
      %p165 = por %p163, %p164
      %p166 = scmp.ne.s32.totalorder %s158, %s160
      %p167 = scmp.eq.s32.totalorder %s33, 1
      %p168 = por %p166, %p167
      %p169 = scmp.ne.s32.totalorder %s160, %s161
      %p170 = scmp.eq.s32.totalorder %s33, 0
      %p171 = por %p169, %p170
      %p172 = scmp.ne.s32.totalorder %s160, %s161
      %p173 = scmp.eq.s32.totalorder %s34, 1
      %p174 = por %p172, %p173
      %p176 = scmp.ne.s32.totalorder %s161, %s175
      %p177 = scmp.eq.s32.totalorder %s34, 0
      %p178 = por %p176, %p177
      %s180 = sadd.s32 %s179, 1
      %p183 = scmp.eq.s32.totalorder %s28, 1
      %p184 = scmp.ne.s32.totalorder %s179, %s181
      %p185 = scmp.eq.s32.totalorder %s28, 0
      %p186 = por %p184, %p185
      %p187 = scmp.ne.s32.totalorder %s179, %s181
      %p188 = scmp.eq.s32.totalorder %s33, 1
      %p189 = por %p187, %p188
      %p190 = scmp.ne.s32.totalorder %s181, %s182
      %p191 = scmp.eq.s32.totalorder %s33, 0
      %p192 = por %p190, %p191
      %p193 = scmp.ne.s32.totalorder %s181, %s182
      %p194 = scmp.eq.s32.totalorder %s34, 1
      %p195 = por %p193, %p194
      %p197 = scmp.ne.s32.totalorder %s182, %s196
      %p198 = scmp.eq.s32.totalorder %s34, 0
      %p199 = por %p197, %p198
      %s201 = sadd.s32 %s200, 1
      %p204 = scmp.eq.s32.totalorder %s28, 1
      %p205 = scmp.ne.s32.totalorder %s200, %s202
      %p206 = scmp.eq.s32.totalorder %s28, 0
      %p207 = por %p205, %p206
      %p208 = scmp.ne.s32.totalorder %s200, %s202
      %p209 = scmp.eq.s32.totalorder %s33, 1
      %p210 = por %p208, %p209
      %p211 = scmp.ne.s32.totalorder %s202, %s203
      %p212 = scmp.eq.s32.totalorder %s33, 0
      %p213 = por %p211, %p212
      %p214 = scmp.ne.s32.totalorder %s202, %s203
      %p215 = scmp.eq.s32.totalorder %s34, 1
      %p216 = por %p214, %p215
      %p218 = scmp.ne.s32.totalorder %s203, %s217
      %p219 = scmp.eq.s32.totalorder %s34, 0
      %p220 = por %p218, %p219
      %s222 = sadd.s32 %s221, 1
      %p225 = scmp.eq.s32.totalorder %s28, 1
      %p226 = scmp.ne.s32.totalorder %s221, %s223
      %p227 = scmp.eq.s32.totalorder %s28, 0
      %p228 = por %p226, %p227
      %p229 = scmp.ne.s32.totalorder %s221, %s223
      %p230 = scmp.eq.s32.totalorder %s33, 1
      %p231 = por %p229, %p230
      %p232 = scmp.ne.s32.totalorder %s223, %s224
      %p233 = scmp.eq.s32.totalorder %s33, 0
      %p234 = por %p232, %p233
      %p235 = scmp.ne.s32.totalorder %s223, %s224
      %p236 = scmp.eq.s32.totalorder %s34, 1
      %p237 = por %p235, %p236
      %p239 = scmp.ne.s32.totalorder %s224, %s238
      %p240 = scmp.eq.s32.totalorder %s34, 0
      %p241 = por %p239, %p240
      %s242 = ssub.s32 %s35, %s47
      %s243 = ssub.s32 %s36, %s43
      %s244 = sor.u32 %s242, %s243
      %p245 = scmp.eq.s32.totalorder %s244, 0
      %s247 = sadd.s32 %s246, 1
      %s248 = scalar_select %p245, %s246, %s247
      %p251 = pneg %p245
      %p252 = scmp.eq.s32.totalorder %s28, 1
      %p253 = por %p251, %p252
      %p254 = scmp.ne.s32.totalorder %s246, %s249
      %p255 = scmp.eq.s32.totalorder %s28, 0
      %p256 = por %p254, %p255
      %p257 = scmp.ne.s32.totalorder %s246, %s249
      %p258 = scmp.eq.s32.totalorder %s33, 1
      %p259 = por %p257, %p258
      %p260 = scmp.ne.s32.totalorder %s249, %s250
      %p261 = scmp.eq.s32.totalorder %s33, 0
      %p262 = por %p260, %p261
      %p263 = scmp.ne.s32.totalorder %s249, %s250
      %p264 = scmp.eq.s32.totalorder %s34, 1
      %p265 = por %p263, %p264
      %p267 = scmp.ne.s32.totalorder %s250, %s266
      %p268 = scmp.eq.s32.totalorder %s34, 0
      %p269 = por %p267, %p268
      %s270 = ssub.s32 %s35, %s47
      %s271 = ssub.s32 %s36, %s43
      %s272 = sor.u32 %s270, %s271
      %p273 = scmp.eq.s32.totalorder %s272, 0
      %s275 = sadd.s32 %s274, 1
      %s276 = scalar_select %p273, %s274, %s275
      %p279 = pneg %p273
      %p280 = scmp.eq.s32.totalorder %s28, 1
      %p281 = por %p279, %p280
      %p282 = scmp.ne.s32.totalorder %s274, %s277
      %p283 = scmp.eq.s32.totalorder %s28, 0
      %p284 = por %p282, %p283
      %p285 = scmp.ne.s32.totalorder %s274, %s277
      %p286 = scmp.eq.s32.totalorder %s33, 1
      %p287 = por %p285, %p286
      %p288 = scmp.ne.s32.totalorder %s277, %s278
      %p289 = scmp.eq.s32.totalorder %s33, 0
      %p290 = por %p288, %p289
      %p291 = scmp.ne.s32.totalorder %s277, %s278
      %p292 = scmp.eq.s32.totalorder %s34, 1
      %p293 = por %p291, %p292
      %p295 = scmp.ne.s32.totalorder %s278, %s294
      %p296 = scmp.eq.s32.totalorder %s34, 0
      %p297 = por %p295, %p296
      %p298 = scmp.le.s32.totalorder 1, %s28
      %p299 = scmp.lt.s32.totalorder %s28, 3
      %p300 = pnand %p298, %p299
      %p301 = pneg %p300
      // Predicated region
      $region9: #{tpu_custom_call.1} parent=5 // pred_check
        _
      $region10: #{tpu_custom_call.1} parent=5 // pred_check_branch
        %303 = sbr.rel (%p300) target = $region12
      $region11: #{tpu_custom_call.1} parent=5 // pred_region
        %s304 = ssub.s32 %s28, 1
        // Predicated region
        $region13: #{tpu_custom_call.1} parent=11 // pred_check
          %p305 = pneg %p87
        $region14: #{tpu_custom_call.1} parent=11 // pred_check_branch
          %307 = sbr.rel (%p305) target = $region16
        $region15: #{tpu_custom_call.1} parent=11 // pred_region
          %s309 = ssub.s32 256, 256
          %310 = vsyncadd [#allocation9], %s309
          %s311 = sshll.u32 [#allocation8], 4
          %s312 = int_to_ptr.vmem [resolvable:$true] %s311
          %317 = dma.hbm_to_vmem [thread:$0]  %s1, 256, %s312, [#allocation9], 64, 64, 4
        $region16: #{tpu_custom_call.1} parent=11 // pred_fallthru
          _
        // Predicated region
        $region17: #{tpu_custom_call.1} parent=11 // pred_check
          %p318 = pneg %p108
        $region18: #{tpu_custom_call.1} parent=11 // pred_check_branch
          %320 = sbr.rel (%p318) target = $region20
        $region19: #{tpu_custom_call.1} parent=11 // pred_region
          _
        $region20: #{tpu_custom_call.1} parent=11 // pred_fallthru
          _
        // Predicated region
        $region21: #{tpu_custom_call.1} parent=11 // pred_check
          %p321 = pneg %p129
        $region22: #{tpu_custom_call.1} parent=11 // pred_check_branch
          %323 = sbr.rel (%p321) target = $region24
        $region23: #{tpu_custom_call.1} parent=11 // pred_region
          %s325 = ssub.s32 256, 256
          %326 = vsyncadd [#allocation9], %s325
          %s327 = sshll.u32 [#allocation10], 4
          %s328 = int_to_ptr.vmem [resolvable:$true] %s327
          %333 = dma.hbm_to_vmem [thread:$0]  %s3, 256, %s328, [#allocation9], 64, 64, 4
        $region24: #{tpu_custom_call.1} parent=11 // pred_fallthru
          _
        // Predicated region
        $region25: #{tpu_custom_call.1} parent=11 // pred_check
          %p334 = pneg %p150
        $region26: #{tpu_custom_call.1} parent=11 // pred_check_branch
          %336 = sbr.rel (%p334) target = $region28
        $region27: #{tpu_custom_call.1} parent=11 // pred_region
          _
        $region28: #{tpu_custom_call.1} parent=11 // pred_fallthru
          _
        // Predicated region
        $region29: #{tpu_custom_call.1} parent=11 // pred_check
          %p337 = pneg %p171
        $region30: #{tpu_custom_call.1} parent=11 // pred_check_branch
          %339 = sbr.rel (%p337) target = $region32
        $region31: #{tpu_custom_call.1} parent=11 // pred_region
          _
        $region32: #{tpu_custom_call.1} parent=11 // pred_fallthru
          _
        // Predicated region
        $region33: #{tpu_custom_call.1} parent=11 // pred_check
          %p340 = pneg %p192
        $region34: #{tpu_custom_call.1} parent=11 // pred_check_branch
          %342 = sbr.rel (%p340) target = $region36
        $region35: #{tpu_custom_call.1} parent=11 // pred_region
          _
        $region36: #{tpu_custom_call.1} parent=11 // pred_fallthru
          _
        // Predicated region
        $region37: #{tpu_custom_call.1} parent=11 // pred_check
          %p343 = pneg %p213
        $region38: #{tpu_custom_call.1} parent=11 // pred_check_branch
          %345 = sbr.rel (%p343) target = $region40
        $region39: #{tpu_custom_call.1} parent=11 // pred_region
          %s347 = ssub.s32 256, 256
          %348 = vsyncadd [#allocation12], %s347
          %s349 = sshll.u32 [#allocation11], 4
          %s350 = int_to_ptr.vmem [resolvable:$true] %s349
          %355 = dma.hbm_to_vmem [thread:$0]  %s7, 256, %s350, [#allocation12], 64, 64, 4
        $region40: #{tpu_custom_call.1} parent=11 // pred_fallthru
          _
        // Predicated region
        $region41: #{tpu_custom_call.1} parent=11 // pred_check
          %p356 = pneg %p234
        $region42: #{tpu_custom_call.1} parent=11 // pred_check_branch
          %358 = sbr.rel (%p356) target = $region44
        $region43: #{tpu_custom_call.1} parent=11 // pred_region
          _
        $region44: #{tpu_custom_call.1} parent=11 // pred_fallthru
          _
      $region12: #{tpu_custom_call.1} parent=5 // pred_fallthru
        _
      %p359 = scmp.lt.s32.totalorder %s28, 2
      // Predicated region
      $region45: #{tpu_custom_call.1} parent=5 // pred_check
        %p360 = pneg %p359
      $region46: #{tpu_custom_call.1} parent=5 // pred_check_branch
        %362 = sbr.rel (%p360) target = $region48
      $region47: #{tpu_custom_call.1} parent=5 // pred_region
        // Predicated region
        $region49: #{tpu_custom_call.1} parent=47 // pred_check
          %p363 = pneg %p60
        $region50: #{tpu_custom_call.1} parent=47 // pred_check_branch
          %365 = sbr.rel (%p363) target = $region52
        $region51: #{tpu_custom_call.1} parent=47 // pred_region
          %s366 = sand.u32 %s50, 1
          %s367 = scalar_lea.sflag [#allocation6], %s366
          %s368 = sand.u32 %s50, 1
          %s369 = smul.addr %s368, 8
          %s370 = scalar_lea.vmem [#allocation5], %s369
          %s372 = ssub.s32 128, 128
          %373 = vsyncadd %s367, %s372
          %s374 = smul.addr %s35, 128
          %s375 = scalar_lea.hbm %s0, %s374
          %s377 = sshll.u32 %s370, 4
          %s378 = int_to_ptr.vmem [resolvable:$true] %s377
          %380 = dma.hbm_to_vmem [thread:$0]  %s375, 128, %s378, %s367
        $region52: #{tpu_custom_call.1} parent=47 // pred_fallthru
          _
      $region48: #{tpu_custom_call.1} parent=5 // pred_fallthru
        _
      %p381 = scmp.le.s32.totalorder 1, %s28
      %p382 = scmp.lt.s32.totalorder %s28, 3
      %p383 = pnand %p381, %p382
      %p384 = pneg %p383
      // Predicated region
      $region53: #{tpu_custom_call.1} parent=5 // pred_check
        _
      $region54: #{tpu_custom_call.1} parent=5 // pred_check_branch
        %386 = sbr.rel (%p383) target = $region56
      $region55: #{tpu_custom_call.1} parent=5 // pred_region
        %s387 = ssub.s32 %s28, 1
        %s388 = sand.u32 %s53, 1
        %s389 = scalar_lea.sflag [#allocation6], %s388
        %s390 = sand.u32 %s53, 1
        %s391 = smul.addr %s390, 8
        %s392 = scalar_lea.vmem [#allocation5], %s391
        // Predicated region
        $region57: #{tpu_custom_call.1} parent=55 // pred_check
          %p393 = pneg %p66
        $region58: #{tpu_custom_call.1} parent=55 // pred_check_branch
          %395 = sbr.rel (%p393) target = $region60
        $region59: #{tpu_custom_call.1} parent=55 // pred_region
          %396 = dma.done %s389, 128
        $region60: #{tpu_custom_call.1} parent=55 // pred_fallthru
          _
        // Predicated region
        $region61: #{tpu_custom_call.1} parent=55 // pred_check
          %p397 = pneg %p87
        $region62: #{tpu_custom_call.1} parent=55 // pred_check_branch
          %399 = sbr.rel (%p397) target = $region64
        $region63: #{tpu_custom_call.1} parent=55 // pred_region
          %400 = dma.done [#allocation9], 256
        $region64: #{tpu_custom_call.1} parent=55 // pred_fallthru
          _
        // Predicated region
        $region65: #{tpu_custom_call.1} parent=55 // pred_check
          %p401 = pneg %p129
        $region66: #{tpu_custom_call.1} parent=55 // pred_check_branch
          %403 = sbr.rel (%p401) target = $region68
        $region67: #{tpu_custom_call.1} parent=55 // pred_region
          %404 = dma.done [#allocation9], 256
        $region68: #{tpu_custom_call.1} parent=55 // pred_fallthru
          _
        // Predicated region
        $region69: #{tpu_custom_call.1} parent=55 // pred_check
          %p405 = pneg %p213
        $region70: #{tpu_custom_call.1} parent=55 // pred_check_branch
          %407 = sbr.rel (%p405) target = $region72
        $region71: #{tpu_custom_call.1} parent=55 // pred_region
          %408 = dma.done [#allocation12], 256
        $region72: #{tpu_custom_call.1} parent=55 // pred_fallthru
          _
        %s409 = sand.u32 %s53, 1
        %s410 = scalar_lea.sflag [#allocation6], %s409
        %s411 = sand.u32 %s53, 1
        %s412 = smul.addr %s411, 8
        %s413 = scalar_lea.vmem [#allocation5], %s412
        %p414 = pneg %p66
        %p415 = pneg %p63
        %p416 = pneg %p87
        %p417 = pneg %p84
        %p418 = pneg %p108
        %p419 = pneg %p105
        %p420 = pneg %p129
        %p421 = pneg %p126
        %p422 = pneg %p150
        %p423 = pneg %p147
        %p424 = pneg %p171
        %p425 = pneg %p168
        %p426 = pneg %p192
        %p427 = pneg %p189
        %p428 = pneg %p213
        %p429 = pneg %p210
        %p430 = pneg %p234
        %p431 = pneg %p231
        %p432 = pneg %p262
        %p433 = pneg %p259
        %s434 = sand.u32 %s249, 1
        %s435 = scalar_lea.sflag [#allocation7], %s434
        %s436 = sand.u32 %s249, 1
        %s437 = smul.addr %s436, 8
        %s438 = scalar_lea.vmem [#allocation13], %s437
        %p439 = pneg %p290
        %p440 = pneg %p287
        %s441 = sand.u32 %s277, 1
        %s442 = scalar_lea.sflag [#allocation15], %s441
        %s443 = sand.u32 %s277, 1
        %s444 = smul.addr %s443, 32
        %s445 = scalar_lea.vmem [#allocation14], %s444
        %p447 = scmp.eq.s32.totalorder %s38, 0
        // Predicated region
        $region73: #{tpu_custom_call.1} parent=55 // pred_check
          %p448 = pneg %p447
        $region74: #{tpu_custom_call.1} parent=55 // pred_check_branch
          %450 = sbr.rel (%p448) target = $region76
        $region75: #{tpu_custom_call.1} parent=55 // pred_region
          %v451 = vld [vmem:[%s392] sm:$0xff]
          %v452 = vpack.c.bf16 %v451, %v451
          %v453 = vld [vmem:[#allocation10] sm:$0xf]
          %v454 = vld [vmem:[#allocation10 + $0x4] sm:$0xf]
          %v455 = vld [vmem:[#allocation10 + $0x8] sm:$0xf]
          %v456 = vld [vmem:[#allocation10 + $0xc] sm:$0xf]
          %v457 = vld [vmem:[%s4] sm:$0x1]
          %v459 = vlaneseq
          %v460 = vshrl.u32 %v459, 7
          %v461 = vsub.s32 0, %v460
          %v462 = vrot.slane %v457, %v461
          %v468 = vunpack.c.l.b16 %v453
          %v469 = vunpack.c.l.b16 %v454
          %v470 = vunpack.c.l.b16 %v455
          %v471 = vunpack.c.l.b16 %v456
          %v472 = vpack.c.b16 %v469, %v468
          %v473 = vpack.c.b16 %v471, %v470
          %vm476 = vcmask 261120
          %v478 = vsel %vm476, %v452, 0
          %480 = vmatprep.subr.bf16.mxu0 0
          %481 = vmatpush1.bf16.msra.mxu0 %v472
          %482 = vmatprep.subr.bf16.mxu0 0
          %483 = vmatpush1.bf16.msra.mxu0 %v473
          %484 = vmatprep.subr.bf16.mxu0 0
          %485 = vmatpush1.bf16.msra.mxu0 0
          %486 = vmatprep.subr.bf16.mxu0 0
          %487 = vmatpush1.bf16.msra.mxu0 0
          %488 = vmatprep.subr.bf16.mxu0 0
          %489 = vmatpush1.bf16.msra.mxu0 0
          %490 = vmatprep.subr.bf16.mxu0 0
          %491 = vmatpush1.bf16.msra.mxu0 0
          %492 = vmatprep.subr.bf16.mxu0 0
          %493 = vmatpush1.bf16.msra.mxu0 0
          %494 = vmatprep.subr.bf16.mxu0 0
          %495 = vmatpush1.bf16.msra.mxu0 0
          %496 = vmatprep.subr.bf16.mxu0 0
          %497 = vmatpush1.bf16.msra.mxu0 0
          %498 = vmatprep.subr.bf16.mxu0 0
          %499 = vmatpush1.bf16.msra.mxu0 0
          %500 = vmatprep.subr.bf16.mxu0 0
          %501 = vmatpush1.bf16.msra.mxu0 0
          %502 = vmatprep.subr.bf16.mxu0 0
          %503 = vmatpush1.bf16.msra.mxu0 0
          %504 = vmatprep.subr.bf16.mxu0 0
          %505 = vmatpush1.bf16.msra.mxu0 0
          %506 = vmatprep.subr.bf16.mxu0 0
          %507 = vmatpush1.bf16.msra.mxu0 0
          %508 = vmatprep.subr.bf16.mxu0 0
          %509 = vmatpush1.bf16.msra.mxu0 0
          %510 = vmatprep.subr.bf16.mxu0 0
          %511 = vmatpush1.bf16.msra.mxu0 0
          %512 = vmatprep.mubr.bf16.mxu0 0
          %513 = vmatmul.mubr.bf16.gmra.mrb[0].mxu0 %v478
          %v514 = vpop.f32.mrb[0].mxu0
          %v515 = vadd.f32 %v462, %v514
          %v516 = vpop.f32.mrb[0].mxu0
          %v517 = vpop.f32.mrb[0].mxu0
          %v518 = vpop.f32.mrb[0].mxu0
          %519 = vdwg.mxu0
          %v520 = vld [vmem:[%s5] sm:$0xf]
          %v521 = vld [vmem:[%s5 + $0x4] sm:$0xf]
          %v522 = vld [vmem:[%s5 + $0x8] sm:$0xf]
          %v523 = vld [vmem:[%s5 + $0xc] sm:$0xf]
          %v524 = vld [vmem:[%s6] sm:$0x1]
          %v526 = vlaneseq
          %v527 = vshrl.u32 %v526, 7
          %v528 = vsub.s32 0, %v527
          %v529 = vrot.slane %v524, %v528
          %v535 = vunpack.c.l.b16 %v520
          %v536 = vunpack.c.l.b16 %v521
          %v537 = vunpack.c.l.b16 %v522
          %v538 = vunpack.c.l.b16 %v523
          %v539 = vpack.c.b16 %v536, %v535
          %v540 = vpack.c.b16 %v538, %v537
          %543 = vmatprep.subr.bf16.mxu0 0
          %544 = vmatpush1.bf16.msra.mxu0 %v539
          %545 = vmatprep.subr.bf16.mxu0 0
          %546 = vmatpush1.bf16.msra.mxu0 %v540
          %547 = vmatprep.subr.bf16.mxu0 0
          %548 = vmatpush1.bf16.msra.mxu0 0
          %549 = vmatprep.subr.bf16.mxu0 0
          %550 = vmatpush1.bf16.msra.mxu0 0
          %551 = vmatprep.subr.bf16.mxu0 0
          %552 = vmatpush1.bf16.msra.mxu0 0
          %553 = vmatprep.subr.bf16.mxu0 0
          %554 = vmatpush1.bf16.msra.mxu0 0
          %555 = vmatprep.subr.bf16.mxu0 0
          %556 = vmatpush1.bf16.msra.mxu0 0
          %557 = vmatprep.subr.bf16.mxu0 0
          %558 = vmatpush1.bf16.msra.mxu0 0
          %559 = vmatprep.subr.bf16.mxu0 0
          %560 = vmatpush1.bf16.msra.mxu0 0
          %561 = vmatprep.subr.bf16.mxu0 0
          %562 = vmatpush1.bf16.msra.mxu0 0
          %563 = vmatprep.subr.bf16.mxu0 0
          %564 = vmatpush1.bf16.msra.mxu0 0
          %565 = vmatprep.subr.bf16.mxu0 0
          %566 = vmatpush1.bf16.msra.mxu0 0
          %567 = vmatprep.subr.bf16.mxu0 0
          %568 = vmatpush1.bf16.msra.mxu0 0
          %569 = vmatprep.subr.bf16.mxu0 0
          %570 = vmatpush1.bf16.msra.mxu0 0
          %571 = vmatprep.subr.bf16.mxu0 0
          %572 = vmatpush1.bf16.msra.mxu0 0
          %573 = vmatprep.subr.bf16.mxu0 0
          %574 = vmatpush1.bf16.msra.mxu0 0
          %575 = vmatprep.mubr.bf16.mxu0 0
          %576 = vmatmul.mubr.bf16.gmra.mrb[0].mxu0 %v478
          %v577 = vpop.f32.mrb[0].mxu0
          %v578 = vadd.f32 %v529, %v577
          %v579 = vpop.f32.mrb[0].mxu0
          %v580 = vpop.f32.mrb[0].mxu0
          %v581 = vpop.f32.mrb[0].mxu0
          %582 = vdwg.mxu0
          %v583 = vpack.c.bf16 %v515, %v515
          %vm584 = vcmask 257024
          %585 = vst.msk [vmem:[#allocation2] sm:$0xf] %vm584, %v583
          %v586 = vpack.c.bf16 %v578, %v578
          %587 = vst.msk [vmem:[#allocation3] sm:$0xf] %vm584, %v586
        $region76: #{tpu_custom_call.1} parent=55 // pred_fallthru
          _
        %s588 = smul.u32 %s38, 8
        %s589 = scalar_lea.vmem %s392, %s588 [#allocation5]
        %v590 = vld [vmem:[%s589] sm:$0xff]
        %v591 = vpack.c.bf16 %v590, %v590
        %v592 = vld [vmem:[#allocation8] sm:$0xf]
        %v593 = vld [vmem:[#allocation8 + $0x4] sm:$0xf]
        %v594 = vld [vmem:[#allocation8 + $0x8] sm:$0xf]
        %v595 = vld [vmem:[#allocation8 + $0xc] sm:$0xf]
        %v596 = vld [vmem:[%s2] sm:$0x1]
        %v598 = vlaneseq
        %v599 = vshrl.u32 %v598, 7
        %v600 = vsub.s32 0, %v599
        %v601 = vrot.slane %v596, %v600
        %v607 = vunpack.c.l.b16 %v592
        %v608 = vunpack.c.l.b16 %v593
        %v609 = vunpack.c.l.b16 %v594
        %v610 = vunpack.c.l.b16 %v595
        %v611 = vpack.c.b16 %v608, %v607
        %v612 = vpack.c.b16 %v610, %v609
        %vm615 = vcmask 261120
        %v617 = vsel %vm615, %v591, 0
        %619 = vmatprep.subr.bf16.mxu0 0
        %620 = vmatpush1.bf16.msra.mxu0 %v611
        %621 = vmatprep.subr.bf16.mxu0 0
        %622 = vmatpush1.bf16.msra.mxu0 %v612
        %623 = vmatprep.subr.bf16.mxu0 0
        %624 = vmatpush1.bf16.msra.mxu0 0
        %625 = vmatprep.subr.bf16.mxu0 0
        %626 = vmatpush1.bf16.msra.mxu0 0
        %627 = vmatprep.subr.bf16.mxu0 0
        %628 = vmatpush1.bf16.msra.mxu0 0
        %629 = vmatprep.subr.bf16.mxu0 0
        %630 = vmatpush1.bf16.msra.mxu0 0
        %631 = vmatprep.subr.bf16.mxu0 0
        %632 = vmatpush1.bf16.msra.mxu0 0
        %633 = vmatprep.subr.bf16.mxu0 0
        %634 = vmatpush1.bf16.msra.mxu0 0
        %635 = vmatprep.subr.bf16.mxu0 0
        %636 = vmatpush1.bf16.msra.mxu0 0
        %637 = vmatprep.subr.bf16.mxu0 0
        %638 = vmatpush1.bf16.msra.mxu0 0
        %639 = vmatprep.subr.bf16.mxu0 0
        %640 = vmatpush1.bf16.msra.mxu0 0
        %641 = vmatprep.subr.bf16.mxu0 0
        %642 = vmatpush1.bf16.msra.mxu0 0
        %643 = vmatprep.subr.bf16.mxu0 0
        %644 = vmatpush1.bf16.msra.mxu0 0
        %645 = vmatprep.subr.bf16.mxu0 0
        %646 = vmatpush1.bf16.msra.mxu0 0
        %647 = vmatprep.subr.bf16.mxu0 0
        %648 = vmatpush1.bf16.msra.mxu0 0
        %649 = vmatprep.subr.bf16.mxu0 0
        %650 = vmatpush1.bf16.msra.mxu0 0
        %651 = vmatprep.mubr.bf16.mxu0 0
        %652 = vmatmul.mubr.bf16.gmra.mrb[0].mxu0 %v617
        %v653 = vpop.f32.mrb[0].mxu0
        %v654 = vadd.f32 %v601, %v653
        %v655 = vpop.f32.mrb[0].mxu0
        %v656 = vpop.f32.mrb[0].mxu0
        %v657 = vpop.f32.mrb[0].mxu0
        %658 = vdwg.mxu0
        %v659 = vmul.f32 %v654, 0.35355338
        %v660 = vpack.c.bf16 %v659, %v659
        %v661 = vld [vmem:[#allocation2] sm:$0xf]
        %v662 = vld [vmem:[#allocation3] sm:$0xf]
        %v663 = vlaneseq
        %v664 = vshrl.u32 %v663, 7
        %v665 = vstv %s588
        %v666 = vadd.s32 %v664, %v665
        %v667 = vlaneseq
        %v668 = vand.u32 %v667, 127
        %vm669 = vcmp.le.s32.totalorder %v668, %v666
        %vm670 = vcmask 64512
        %v672 = vsel %vm670, %v660, 0
        %v675 = vsel %vm670, %v661, 0
        %677 = vmatprep.subr.bf16.mxu0 0
        %678 = vmatpush1.bf16.xpose.msra.mxu0 %v675
        %679 = vmatprep.subr.bf16.mxu0 0
        %680 = vmatpush1.bf16.xpose.msra.mxu0 0
        %681 = vmatprep.subr.bf16.mxu0 0
        %682 = vmatpush1.bf16.xpose.msra.mxu0 0
        %683 = vmatprep.subr.bf16.mxu0 0
        %684 = vmatpush1.bf16.xpose.msra.mxu0 0
        %685 = vmatprep.subr.bf16.mxu0 0
        %686 = vmatpush1.bf16.xpose.msra.mxu0 0
        %687 = vmatprep.subr.bf16.mxu0 0
        %688 = vmatpush1.bf16.xpose.msra.mxu0 0
        %689 = vmatprep.subr.bf16.mxu0 0
        %690 = vmatpush1.bf16.xpose.msra.mxu0 0
        %691 = vmatprep.subr.bf16.mxu0 0
        %692 = vmatpush1.bf16.xpose.msra.mxu0 0
        %693 = vmatprep.subr.bf16.mxu0 0
        %694 = vmatpush1.bf16.xpose.msra.mxu0 0
        %695 = vmatprep.subr.bf16.mxu0 0
        %696 = vmatpush1.bf16.xpose.msra.mxu0 0
        %697 = vmatprep.subr.bf16.mxu0 0
        %698 = vmatpush1.bf16.xpose.msra.mxu0 0
        %699 = vmatprep.subr.bf16.mxu0 0
        %700 = vmatpush1.bf16.xpose.msra.mxu0 0
        %701 = vmatprep.subr.bf16.mxu0 0
        %702 = vmatpush1.bf16.xpose.msra.mxu0 0
        %703 = vmatprep.subr.bf16.mxu0 0
        %704 = vmatpush1.bf16.xpose.msra.mxu0 0
        %705 = vmatprep.subr.bf16.mxu0 0
        %706 = vmatpush1.bf16.xpose.msra.mxu0 0
        %707 = vmatprep.subr.bf16.mxu0 0
        %708 = vmatpush1.bf16.xpose.msra.mxu0 0
        %709 = vmatprep.mubr.bf16.mxu0 0
        %710 = vmatmul.mubr.bf16.gmra.mrb[0].mxu0 %v672
        %v711 = vpop.f32.mrb[0].mxu0
        %v712 = vadd.f32 0.0, %v711
        %v713 = vpop.f32.mrb[0].mxu0
        %v714 = vpop.f32.mrb[0].mxu0
        %v715 = vpop.f32.mrb[0].mxu0
        %716 = vdwg.mxu0
        %v717 = vsel %vm669, %v712, -inf
        %v718 = vsel %vm670, %v717, -inf
        %719 = vmax.xlane.f32.xlu0 %v718
        %v720 = vpop.xlane.xlu0 %719
        %v721 = vsub.f32 %v717, %v720
        %v722 = vmul.f32 %v721, 1.442695
        %v723 = vpow.pop %v722
        %v724 = vsel %vm670, %v723, 0.0
        %725 = vadd.xlane.f32.xlu0 %v724
        %v726 = vpop.xlane.xlu0 %725
        %v727 = vrcp.pop %v726
        %v728 = vmul.f32 %v723, %v727
        %729 = vst.msk [vmem:[%s445] sm:$0xff] %vm670, %v728
        %v730 = vpack.c.bf16 %v728, %v728
        %v732 = vsel %vm670, %v730, 0
        %vm734 = vcmask 1043456
        %v736 = vsel %vm734, %v662, 0
        %738 = vmatprep.subr.bf16.mxu0 0
        %739 = vmatpush1.bf16.msra.mxu0 %v736
        %740 = vmatprep.subr.bf16.mxu0 0
        %741 = vmatpush1.bf16.msra.mxu0 0
        %742 = vmatprep.subr.bf16.mxu0 0
        %743 = vmatpush1.bf16.msra.mxu0 0
        %744 = vmatprep.subr.bf16.mxu0 0
        %745 = vmatpush1.bf16.msra.mxu0 0
        %746 = vmatprep.subr.bf16.mxu0 0
        %747 = vmatpush1.bf16.msra.mxu0 0
        %748 = vmatprep.subr.bf16.mxu0 0
        %749 = vmatpush1.bf16.msra.mxu0 0
        %750 = vmatprep.subr.bf16.mxu0 0
        %751 = vmatpush1.bf16.msra.mxu0 0
        %752 = vmatprep.subr.bf16.mxu0 0
        %753 = vmatpush1.bf16.msra.mxu0 0
        %754 = vmatprep.subr.bf16.mxu0 0
        %755 = vmatpush1.bf16.msra.mxu0 0
        %756 = vmatprep.subr.bf16.mxu0 0
        %757 = vmatpush1.bf16.msra.mxu0 0
        %758 = vmatprep.subr.bf16.mxu0 0
        %759 = vmatpush1.bf16.msra.mxu0 0
        %760 = vmatprep.subr.bf16.mxu0 0
        %761 = vmatpush1.bf16.msra.mxu0 0
        %762 = vmatprep.subr.bf16.mxu0 0
        %763 = vmatpush1.bf16.msra.mxu0 0
        %764 = vmatprep.subr.bf16.mxu0 0
        %765 = vmatpush1.bf16.msra.mxu0 0
        %766 = vmatprep.subr.bf16.mxu0 0
        %767 = vmatpush1.bf16.msra.mxu0 0
        %768 = vmatprep.subr.bf16.mxu0 0
        %769 = vmatpush1.bf16.msra.mxu0 0
        %770 = vmatprep.mubr.bf16.mxu0 0
        %771 = vmatmul.mubr.bf16.gmra.mrb[0].mxu0 %v732
        %v772 = vpop.f32.mrb[0].mxu0
        %v773 = vadd.f32 0.0, %v772
        %v774 = vpop.f32.mrb[0].mxu0
        %v775 = vpop.f32.mrb[0].mxu0
        %v776 = vpop.f32.mrb[0].mxu0
        %777 = vdwg.mxu0
        %v778 = vpack.c.bf16 %v773, %v773
        %vm779 = vcmask 60416
        %780 = vst.msk [vmem:[#allocation4] sm:$0xf] %vm779, %v778
        %782 = vrot.lane.b32.xlu0 %v660, 120
        %v783 = vpop.permute.xlu0 %782
        %v785 = vunpack.c.l.b16 %v661
        %v786 = vpack.c.b16 %v785, %v785
        %787 = vrot.lane.b32.xlu0 %v786, 120
        %v788 = vpop.permute.xlu0 %787
        %v790 = vsel %vm670, %v783, 0
        %v793 = vsel %vm670, %v788, 0
        %795 = vmatprep.subr.bf16.mxu0 0
        %796 = vmatpush1.bf16.xpose.msra.mxu0 %v793
        %797 = vmatprep.subr.bf16.mxu0 0
        %798 = vmatpush1.bf16.xpose.msra.mxu0 0
        %799 = vmatprep.subr.bf16.mxu0 0
        %800 = vmatpush1.bf16.xpose.msra.mxu0 0
        %801 = vmatprep.subr.bf16.mxu0 0
        %802 = vmatpush1.bf16.xpose.msra.mxu0 0
        %803 = vmatprep.subr.bf16.mxu0 0
        %804 = vmatpush1.bf16.xpose.msra.mxu0 0
        %805 = vmatprep.subr.bf16.mxu0 0
        %806 = vmatpush1.bf16.xpose.msra.mxu0 0
        %807 = vmatprep.subr.bf16.mxu0 0
        %808 = vmatpush1.bf16.xpose.msra.mxu0 0
        %809 = vmatprep.subr.bf16.mxu0 0
        %810 = vmatpush1.bf16.xpose.msra.mxu0 0
        %811 = vmatprep.subr.bf16.mxu0 0
        %812 = vmatpush1.bf16.xpose.msra.mxu0 0
        %813 = vmatprep.subr.bf16.mxu0 0
        %814 = vmatpush1.bf16.xpose.msra.mxu0 0
        %815 = vmatprep.subr.bf16.mxu0 0
        %816 = vmatpush1.bf16.xpose.msra.mxu0 0
        %817 = vmatprep.subr.bf16.mxu0 0
        %818 = vmatpush1.bf16.xpose.msra.mxu0 0
        %819 = vmatprep.subr.bf16.mxu0 0
        %820 = vmatpush1.bf16.xpose.msra.mxu0 0
        %821 = vmatprep.subr.bf16.mxu0 0
        %822 = vmatpush1.bf16.xpose.msra.mxu0 0
        %823 = vmatprep.subr.bf16.mxu0 0
        %824 = vmatpush1.bf16.xpose.msra.mxu0 0
        %825 = vmatprep.subr.bf16.mxu0 0
        %826 = vmatpush1.bf16.xpose.msra.mxu0 0
        %827 = vmatprep.mubr.bf16.mxu0 0
        %828 = vmatmul.mubr.bf16.gmra.mrb[0].mxu0 %v790
        %v829 = vpop.f32.mrb[0].mxu0
        %v830 = vadd.f32 0.0, %v829
        %v831 = vpop.f32.mrb[0].mxu0
        %v832 = vpop.f32.mrb[0].mxu0
        %v833 = vpop.f32.mrb[0].mxu0
        %834 = vdwg.mxu0
        %v835 = vsel %vm669, %v830, -inf
        %v836 = vsel %vm670, %v835, -inf
        %837 = vmax.xlane.f32.xlu0 %v836
        %v838 = vpop.xlane.xlu0 %837
        %v839 = vsub.f32 %v835, %v838
        %v840 = vmul.f32 %v839, 1.442695
        %v841 = vpow.pop %v840
        %v842 = vsel %vm670, %v841, 0.0
        %843 = vadd.xlane.f32.xlu0 %v842
        %v844 = vpop.xlane.xlu0 %843
        %v845 = vrcp.pop %v844
        %v846 = vmul.f32 %v841, %v845
        %s847 = scalar_lea.vmem %s445, 8 [#allocation14]
        %848 = vst.msk [vmem:[%s847] sm:$0xff] %vm670, %v846
        %v849 = vpack.c.bf16 %v846, %v846
        %v851 = vunpack.c.l.b16 %v662
        %v852 = vpack.c.b16 %v851, %v851
        %853 = vrot.lane.b32.xlu0 %v852, 120
        %v854 = vpop.permute.xlu0 %853
        %v856 = vsel %vm670, %v849, 0
        %v859 = vsel %vm734, %v854, 0
        %861 = vmatprep.subr.bf16.mxu0 0
        %862 = vmatpush1.bf16.msra.mxu0 %v859
        %863 = vmatprep.subr.bf16.mxu0 0
        %864 = vmatpush1.bf16.msra.mxu0 0
        %865 = vmatprep.subr.bf16.mxu0 0
        %866 = vmatpush1.bf16.msra.mxu0 0
        %867 = vmatprep.subr.bf16.mxu0 0
        %868 = vmatpush1.bf16.msra.mxu0 0
        %869 = vmatprep.subr.bf16.mxu0 0
        %870 = vmatpush1.bf16.msra.mxu0 0
        %871 = vmatprep.subr.bf16.mxu0 0
        %872 = vmatpush1.bf16.msra.mxu0 0
        %873 = vmatprep.subr.bf16.mxu0 0
        %874 = vmatpush1.bf16.msra.mxu0 0
        %875 = vmatprep.subr.bf16.mxu0 0
        %876 = vmatpush1.bf16.msra.mxu0 0
        %877 = vmatprep.subr.bf16.mxu0 0
        %878 = vmatpush1.bf16.msra.mxu0 0
        %879 = vmatprep.subr.bf16.mxu0 0
        %880 = vmatpush1.bf16.msra.mxu0 0
        %881 = vmatprep.subr.bf16.mxu0 0
        %882 = vmatpush1.bf16.msra.mxu0 0
        %883 = vmatprep.subr.bf16.mxu0 0
        %884 = vmatpush1.bf16.msra.mxu0 0
        %885 = vmatprep.subr.bf16.mxu0 0
        %886 = vmatpush1.bf16.msra.mxu0 0
        %887 = vmatprep.subr.bf16.mxu0 0
        %888 = vmatpush1.bf16.msra.mxu0 0
        %889 = vmatprep.subr.bf16.mxu0 0
        %890 = vmatpush1.bf16.msra.mxu0 0
        %891 = vmatprep.subr.bf16.mxu0 0
        %892 = vmatpush1.bf16.msra.mxu0 0
        %893 = vmatprep.mubr.bf16.mxu0 0
        %894 = vmatmul.mubr.bf16.gmra.mrb[0].mxu0 %v856
        %v895 = vpop.f32.mrb[0].mxu0
        %v896 = vadd.f32 0.0, %v895
        %v897 = vpop.f32.mrb[0].mxu0
        %v898 = vpop.f32.mrb[0].mxu0
        %v899 = vpop.f32.mrb[0].mxu0
        %900 = vdwg.mxu0
        %v901 = vpack.c.bf16 %v896, %v896
        %v903 = vunpack.c.l.b16 %v901
        %v904 = vpack.c.b16 %v903, %v903
        %905 = vrot.lane.b32.xlu0 %v904, 8
        %v906 = vpop.permute.xlu0 %905
        %vm908 = vcmask 126016
        %909 = vst.msk [vmem:[#allocation4] sm:$0xf] %vm908, %v906
        %910 = vrot.lane.b32.xlu0 %v660, 112
        %v911 = vpop.permute.xlu0 %910
        %912 = vrot.lane.b32.xlu0 %v786, 112
        %v913 = vpop.permute.xlu0 %912
        %v915 = vsel %vm670, %v911, 0
        %v918 = vsel %vm670, %v913, 0
        %920 = vmatprep.subr.bf16.mxu0 0
        %921 = vmatpush1.bf16.xpose.msra.mxu0 %v918
        %922 = vmatprep.subr.bf16.mxu0 0
        %923 = vmatpush1.bf16.xpose.msra.mxu0 0
        %924 = vmatprep.subr.bf16.mxu0 0
        %925 = vmatpush1.bf16.xpose.msra.mxu0 0
        %926 = vmatprep.subr.bf16.mxu0 0
        %927 = vmatpush1.bf16.xpose.msra.mxu0 0
        %928 = vmatprep.subr.bf16.mxu0 0
        %929 = vmatpush1.bf16.xpose.msra.mxu0 0
        %930 = vmatprep.subr.bf16.mxu0 0
        %931 = vmatpush1.bf16.xpose.msra.mxu0 0
        %932 = vmatprep.subr.bf16.mxu0 0
        %933 = vmatpush1.bf16.xpose.msra.mxu0 0
        %934 = vmatprep.subr.bf16.mxu0 0
        %935 = vmatpush1.bf16.xpose.msra.mxu0 0
        %936 = vmatprep.subr.bf16.mxu0 0
        %937 = vmatpush1.bf16.xpose.msra.mxu0 0
        %938 = vmatprep.subr.bf16.mxu0 0
        %939 = vmatpush1.bf16.xpose.msra.mxu0 0
        %940 = vmatprep.subr.bf16.mxu0 0
        %941 = vmatpush1.bf16.xpose.msra.mxu0 0
        %942 = vmatprep.subr.bf16.mxu0 0
        %943 = vmatpush1.bf16.xpose.msra.mxu0 0
        %944 = vmatprep.subr.bf16.mxu0 0
        %945 = vmatpush1.bf16.xpose.msra.mxu0 0
        %946 = vmatprep.subr.bf16.mxu0 0
        %947 = vmatpush1.bf16.xpose.msra.mxu0 0
        %948 = vmatprep.subr.bf16.mxu0 0
        %949 = vmatpush1.bf16.xpose.msra.mxu0 0
        %950 = vmatprep.subr.bf16.mxu0 0
        %951 = vmatpush1.bf16.xpose.msra.mxu0 0
        %952 = vmatprep.mubr.bf16.mxu0 0
        %953 = vmatmul.mubr.bf16.gmra.mrb[0].mxu0 %v915
        %v954 = vpop.f32.mrb[0].mxu0
        %v955 = vadd.f32 0.0, %v954
        %v956 = vpop.f32.mrb[0].mxu0
        %v957 = vpop.f32.mrb[0].mxu0
        %v958 = vpop.f32.mrb[0].mxu0
        %959 = vdwg.mxu0
        %v960 = vsel %vm669, %v955, -inf
        %v961 = vsel %vm670, %v960, -inf
        %962 = vmax.xlane.f32.xlu0 %v961
        %v963 = vpop.xlane.xlu0 %962
        %v964 = vsub.f32 %v960, %v963
        %v965 = vmul.f32 %v964, 1.442695
        %v966 = vpow.pop %v965
        %v967 = vsel %vm670, %v966, 0.0
        %968 = vadd.xlane.f32.xlu0 %v967
        %v969 = vpop.xlane.xlu0 %968
        %v970 = vrcp.pop %v969
        %v971 = vmul.f32 %v966, %v970
        %s972 = scalar_lea.vmem %s445, 16 [#allocation14]
        %973 = vst.msk [vmem:[%s972] sm:$0xff] %vm670, %v971
        %v974 = vpack.c.bf16 %v971, %v971
        %975 = vrot.lane.b32.xlu0 %v852, 112
        %v976 = vpop.permute.xlu0 %975
        %v978 = vsel %vm670, %v974, 0
        %v981 = vsel %vm734, %v976, 0
        %983 = vmatprep.subr.bf16.mxu0 0
        %984 = vmatpush1.bf16.msra.mxu0 %v981
        %985 = vmatprep.subr.bf16.mxu0 0
        %986 = vmatpush1.bf16.msra.mxu0 0
        %987 = vmatprep.subr.bf16.mxu0 0
        %988 = vmatpush1.bf16.msra.mxu0 0
        %989 = vmatprep.subr.bf16.mxu0 0
        %990 = vmatpush1.bf16.msra.mxu0 0
        %991 = vmatprep.subr.bf16.mxu0 0
        %992 = vmatpush1.bf16.msra.mxu0 0
        %993 = vmatprep.subr.bf16.mxu0 0
        %994 = vmatpush1.bf16.msra.mxu0 0
        %995 = vmatprep.subr.bf16.mxu0 0
        %996 = vmatpush1.bf16.msra.mxu0 0
        %997 = vmatprep.subr.bf16.mxu0 0
        %998 = vmatpush1.bf16.msra.mxu0 0
        %999 = vmatprep.subr.bf16.mxu0 0
        %1000 = vmatpush1.bf16.msra.mxu0 0
        %1001 = vmatprep.subr.bf16.mxu0 0
        %1002 = vmatpush1.bf16.msra.mxu0 0
        %1003 = vmatprep.subr.bf16.mxu0 0
        %1004 = vmatpush1.bf16.msra.mxu0 0
        %1005 = vmatprep.subr.bf16.mxu0 0
        %1006 = vmatpush1.bf16.msra.mxu0 0
        %1007 = vmatprep.subr.bf16.mxu0 0
        %1008 = vmatpush1.bf16.msra.mxu0 0
        %1009 = vmatprep.subr.bf16.mxu0 0
        %1010 = vmatpush1.bf16.msra.mxu0 0
        %1011 = vmatprep.subr.bf16.mxu0 0
        %1012 = vmatpush1.bf16.msra.mxu0 0
        %1013 = vmatprep.subr.bf16.mxu0 0
        %1014 = vmatpush1.bf16.msra.mxu0 0
        %1015 = vmatprep.mubr.bf16.mxu0 0
        %1016 = vmatmul.mubr.bf16.gmra.mrb[0].mxu0 %v978
        %v1017 = vpop.f32.mrb[0].mxu0
        %v1018 = vadd.f32 0.0, %v1017
        %v1019 = vpop.f32.mrb[0].mxu0
        %v1020 = vpop.f32.mrb[0].mxu0
        %v1021 = vpop.f32.mrb[0].mxu0
        %1022 = vdwg.mxu0
        %v1023 = vpack.c.bf16 %v1018, %v1018
        %v1025 = vunpack.c.l.b16 %v1023
        %v1026 = vpack.c.b16 %v1025, %v1025
        %1027 = vrot.lane.b32.xlu0 %v1026, 16
        %v1028 = vpop.permute.xlu0 %1027
        %vm1030 = vcmask 191616
        %1031 = vst.msk [vmem:[#allocation4] sm:$0xf] %vm1030, %v1028
        %1032 = vrot.lane.b32.xlu0 %v660, 104
        %v1033 = vpop.permute.xlu0 %1032
        %1034 = vrot.lane.b32.xlu0 %v786, 104
        %v1035 = vpop.permute.xlu0 %1034
        %v1037 = vsel %vm670, %v1033, 0
        %v1040 = vsel %vm670, %v1035, 0
        %1042 = vmatprep.subr.bf16.mxu0 0
        %1043 = vmatpush1.bf16.xpose.msra.mxu0 %v1040
        %1044 = vmatprep.subr.bf16.mxu0 0
        %1045 = vmatpush1.bf16.xpose.msra.mxu0 0
        %1046 = vmatprep.subr.bf16.mxu0 0
        %1047 = vmatpush1.bf16.xpose.msra.mxu0 0
        %1048 = vmatprep.subr.bf16.mxu0 0
        %1049 = vmatpush1.bf16.xpose.msra.mxu0 0
        %1050 = vmatprep.subr.bf16.mxu0 0
        %1051 = vmatpush1.bf16.xpose.msra.mxu0 0
        %1052 = vmatprep.subr.bf16.mxu0 0
        %1053 = vmatpush1.bf16.xpose.msra.mxu0 0
        %1054 = vmatprep.subr.bf16.mxu0 0
        %1055 = vmatpush1.bf16.xpose.msra.mxu0 0
        %1056 = vmatprep.subr.bf16.mxu0 0
        %1057 = vmatpush1.bf16.xpose.msra.mxu0 0
        %1058 = vmatprep.subr.bf16.mxu0 0
        %1059 = vmatpush1.bf16.xpose.msra.mxu0 0
        %1060 = vmatprep.subr.bf16.mxu0 0
        %1061 = vmatpush1.bf16.xpose.msra.mxu0 0
        %1062 = vmatprep.subr.bf16.mxu0 0
        %1063 = vmatpush1.bf16.xpose.msra.mxu0 0
        %1064 = vmatprep.subr.bf16.mxu0 0
        %1065 = vmatpush1.bf16.xpose.msra.mxu0 0
        %1066 = vmatprep.subr.bf16.mxu0 0
        %1067 = vmatpush1.bf16.xpose.msra.mxu0 0
        %1068 = vmatprep.subr.bf16.mxu0 0
        %1069 = vmatpush1.bf16.xpose.msra.mxu0 0
        %1070 = vmatprep.subr.bf16.mxu0 0
        %1071 = vmatpush1.bf16.xpose.msra.mxu0 0
        %1072 = vmatprep.subr.bf16.mxu0 0
        %1073 = vmatpush1.bf16.xpose.msra.mxu0 0
        %1074 = vmatprep.mubr.bf16.mxu0 0
        %1075 = vmatmul.mubr.bf16.gmra.mrb[0].mxu0 %v1037
        %v1076 = vpop.f32.mrb[0].mxu0
        %v1077 = vadd.f32 0.0, %v1076
        %v1078 = vpop.f32.mrb[0].mxu0
        %v1079 = vpop.f32.mrb[0].mxu0
        %v1080 = vpop.f32.mrb[0].mxu0
        %1081 = vdwg.mxu0
        %v1082 = vsel %vm669, %v1077, -inf
        %v1083 = vsel %vm670, %v1082, -inf
        %1084 = vmax.xlane.f32.xlu0 %v1083
        %v1085 = vpop.xlane.xlu0 %1084
        %v1086 = vsub.f32 %v1082, %v1085
        %v1087 = vmul.f32 %v1086, 1.442695
        %v1088 = vpow.pop %v1087
        %v1089 = vsel %vm670, %v1088, 0.0
        %1090 = vadd.xlane.f32.xlu0 %v1089
        %v1091 = vpop.xlane.xlu0 %1090
        %v1092 = vrcp.pop %v1091
        %v1093 = vmul.f32 %v1088, %v1092
        %s1094 = scalar_lea.vmem %s445, 24 [#allocation14]
        %1095 = vst.msk [vmem:[%s1094] sm:$0xff] %vm670, %v1093
        %v1096 = vpack.c.bf16 %v1093, %v1093
        %1097 = vrot.lane.b32.xlu0 %v852, 104
        %v1098 = vpop.permute.xlu0 %1097
        %v1100 = vsel %vm670, %v1096, 0
        %v1103 = vsel %vm734, %v1098, 0
        %1105 = vmatprep.subr.bf16.mxu0 0
        %1106 = vmatpush1.bf16.msra.mxu0 %v1103
        %1107 = vmatprep.subr.bf16.mxu0 0
        %1108 = vmatpush1.bf16.msra.mxu0 0
        %1109 = vmatprep.subr.bf16.mxu0 0
        %1110 = vmatpush1.bf16.msra.mxu0 0
        %1111 = vmatprep.subr.bf16.mxu0 0
        %1112 = vmatpush1.bf16.msra.mxu0 0
        %1113 = vmatprep.subr.bf16.mxu0 0
        %1114 = vmatpush1.bf16.msra.mxu0 0
        %1115 = vmatprep.subr.bf16.mxu0 0
        %1116 = vmatpush1.bf16.msra.mxu0 0
        %1117 = vmatprep.subr.bf16.mxu0 0
        %1118 = vmatpush1.bf16.msra.mxu0 0
        %1119 = vmatprep.subr.bf16.mxu0 0
        %1120 = vmatpush1.bf16.msra.mxu0 0
        %1121 = vmatprep.subr.bf16.mxu0 0
        %1122 = vmatpush1.bf16.msra.mxu0 0
        %1123 = vmatprep.subr.bf16.mxu0 0
        %1124 = vmatpush1.bf16.msra.mxu0 0
        %1125 = vmatprep.subr.bf16.mxu0 0
        %1126 = vmatpush1.bf16.msra.mxu0 0
        %1127 = vmatprep.subr.bf16.mxu0 0
        %1128 = vmatpush1.bf16.msra.mxu0 0
        %1129 = vmatprep.subr.bf16.mxu0 0
        %1130 = vmatpush1.bf16.msra.mxu0 0
        %1131 = vmatprep.subr.bf16.mxu0 0
        %1132 = vmatpush1.bf16.msra.mxu0 0
        %1133 = vmatprep.subr.bf16.mxu0 0
        %1134 = vmatpush1.bf16.msra.mxu0 0
        %1135 = vmatprep.subr.bf16.mxu0 0
        %1136 = vmatpush1.bf16.msra.mxu0 0
        %1137 = vmatprep.mubr.bf16.mxu0 0
        %1138 = vmatmul.mubr.bf16.gmra.mrb[0].mxu0 %v1100
        %v1139 = vpop.f32.mrb[0].mxu0
        %v1140 = vadd.f32 0.0, %v1139
        %v1141 = vpop.f32.mrb[0].mxu0
        %v1142 = vpop.f32.mrb[0].mxu0
        %v1143 = vpop.f32.mrb[0].mxu0
        %1144 = vdwg.mxu0
        %v1145 = vpack.c.bf16 %v1140, %v1140
        %v1147 = vunpack.c.l.b16 %v1145
        %v1148 = vpack.c.b16 %v1147, %v1147
        %1149 = vrot.lane.b32.xlu0 %v1148, 24
        %v1150 = vpop.permute.xlu0 %1149
        %vm1152 = vcmask 257216
        %1153 = vst.msk [vmem:[#allocation4] sm:$0xf] %vm1152, %v1150
        %v1154 = vld [vmem:[#allocation4] sm:$0xf]
        %v1155 = vld [vmem:[#allocation11] sm:$0xf]
        %v1156 = vld [vmem:[#allocation11 + $0x4] sm:$0xf]
        %v1157 = vld [vmem:[#allocation11 + $0x8] sm:$0xf]
        %v1158 = vld [vmem:[#allocation11 + $0xc] sm:$0xf]
        %v1159 = vld [vmem:[%s8] sm:$0x1]
        %v1161 = vlaneseq
        %v1162 = vshrl.u32 %v1161, 7
        %v1163 = vsub.s32 0, %v1162
        %v1164 = vrot.slane %v1159, %v1163
        %v1170 = vunpack.c.l.b16 %v1155
        %v1171 = vunpack.c.l.b16 %v1156
        %v1172 = vunpack.c.l.b16 %v1157
        %v1173 = vunpack.c.l.b16 %v1158
        %v1174 = vpack.c.b16 %v1171, %v1170
        %v1175 = vpack.c.b16 %v1173, %v1172
        %v1179 = vsel %vm615, %v1154, 0
        %1181 = vmatprep.subr.bf16.mxu0 0
        %1182 = vmatpush1.bf16.msra.mxu0 %v1174
        %1183 = vmatprep.subr.bf16.mxu0 0
        %1184 = vmatpush1.bf16.msra.mxu0 %v1175
        %1185 = vmatprep.subr.bf16.mxu0 0
        %1186 = vmatpush1.bf16.msra.mxu0 0
        %1187 = vmatprep.subr.bf16.mxu0 0
        %1188 = vmatpush1.bf16.msra.mxu0 0
        %1189 = vmatprep.subr.bf16.mxu0 0
        %1190 = vmatpush1.bf16.msra.mxu0 0
        %1191 = vmatprep.subr.bf16.mxu0 0
        %1192 = vmatpush1.bf16.msra.mxu0 0
        %1193 = vmatprep.subr.bf16.mxu0 0
        %1194 = vmatpush1.bf16.msra.mxu0 0
        %1195 = vmatprep.subr.bf16.mxu0 0
        %1196 = vmatpush1.bf16.msra.mxu0 0
        %1197 = vmatprep.subr.bf16.mxu0 0
        %1198 = vmatpush1.bf16.msra.mxu0 0
        %1199 = vmatprep.subr.bf16.mxu0 0
        %1200 = vmatpush1.bf16.msra.mxu0 0
        %1201 = vmatprep.subr.bf16.mxu0 0
        %1202 = vmatpush1.bf16.msra.mxu0 0
        %1203 = vmatprep.subr.bf16.mxu0 0
        %1204 = vmatpush1.bf16.msra.mxu0 0
        %1205 = vmatprep.subr.bf16.mxu0 0
        %1206 = vmatpush1.bf16.msra.mxu0 0
        %1207 = vmatprep.subr.bf16.mxu0 0
        %1208 = vmatpush1.bf16.msra.mxu0 0
        %1209 = vmatprep.subr.bf16.mxu0 0
        %1210 = vmatpush1.bf16.msra.mxu0 0
        %1211 = vmatprep.subr.bf16.mxu0 0
        %1212 = vmatpush1.bf16.msra.mxu0 0
        %1213 = vmatprep.mubr.bf16.mxu0 0
        %1214 = vmatmul.mubr.bf16.gmra.mrb[0].mxu0 %v1179
        %v1215 = vpop.f32.mrb[0].mxu0
        %v1216 = vadd.f32 %v1164, %v1215
        %v1217 = vpop.f32.mrb[0].mxu0
        %v1218 = vpop.f32.mrb[0].mxu0
        %v1219 = vpop.f32.mrb[0].mxu0
        %1220 = vdwg.mxu0
        %1221 = vst.msk [vmem:[%s438] sm:$0xff] %vm615, %v1216
        %s1222 = sand.u32 %s249, 1
        %s1223 = scalar_lea.sflag [#allocation7], %s1222
        %s1224 = sand.u32 %s249, 1
        %s1225 = smul.addr %s1224, 8
        %s1226 = scalar_lea.vmem [#allocation13], %s1225
        %s1227 = sand.u32 %s277, 1
        %s1228 = scalar_lea.sflag [#allocation15], %s1227
        %s1229 = sand.u32 %s277, 1
        %s1230 = smul.addr %s1229, 32
        %s1231 = scalar_lea.vmem [#allocation14], %s1230
        // Predicated region
        $region77: #{tpu_custom_call.1} parent=55 // pred_check
          %p1232 = pneg %p259
        $region78: #{tpu_custom_call.1} parent=55 // pred_check_branch
          %1234 = sbr.rel (%p1232) target = $region80
        $region79: #{tpu_custom_call.1} parent=55 // pred_region
          %s1236 = ssub.s32 128, 128
          %1237 = vsyncadd %s1223, %s1236
          %s1238 = sadd.s32 %s38, %s37
          %s1239 = smul.addr %s1238, 128
          %s1240 = scalar_lea.hbm %s9, %s1239
          %s1242 = sshll.u32 %s1226, 4
          %s1243 = int_to_ptr.vmem [resolvable:$true] %s1242
          %1245 = dma.vmem_to_hbm [thread:$0]  %s1243, 128, %s1240, %s1223
        $region80: #{tpu_custom_call.1} parent=55 // pred_fallthru
          _
        // Predicated region
        $region81: #{tpu_custom_call.1} parent=55 // pred_check
          %p1246 = pneg %p287
        $region82: #{tpu_custom_call.1} parent=55 // pred_check_branch
          %1248 = sbr.rel (%p1246) target = $region84
        $region83: #{tpu_custom_call.1} parent=55 // pred_region
          %s1250 = ssub.s32 512, 512
          %1251 = vsyncadd %s1228, %s1250
          %s1252 = smul.addr %s37, 4
          %s1253 = sadd.s32 %s38, %s1252
          %s1254 = smul.addr %s1253, 128
          %s1255 = scalar_lea.hbm %s10, %s1254
          %s1256 = sshll.u32 %s1231, 4
          %s1257 = int_to_ptr.vmem [resolvable:$true] %s1256
          %1262 = dma.vmem_to_hbm [thread:$0]  %s1257, 512, %s1255, %s1228, 128, 128, 8
        $region84: #{tpu_custom_call.1} parent=55 // pred_fallthru
          _
      $region56: #{tpu_custom_call.1} parent=5 // pred_fallthru
        _
      %p1263 = scmp.le.s32.totalorder 2, %s28
      // Predicated region
      $region85: #{tpu_custom_call.1} parent=5 // pred_check
        %p1264 = pneg %p1263
      $region86: #{tpu_custom_call.1} parent=5 // pred_check_branch
        %1266 = sbr.rel (%p1264) target = $region88
      $region87: #{tpu_custom_call.1} parent=5 // pred_region
        %s1267 = ssub.s32 %s28, 2
        // Predicated region
        $region89: #{tpu_custom_call.1} parent=87 // pred_check
          %p1268 = pneg %p265
        $region90: #{tpu_custom_call.1} parent=87 // pred_check_branch
          %1270 = sbr.rel (%p1268) target = $region92
        $region91: #{tpu_custom_call.1} parent=87 // pred_region
          %s1271 = sand.u32 %s250, 1
          %s1272 = scalar_lea.sflag [#allocation7], %s1271
          %s1273 = sand.u32 %s250, 1
          %s1274 = smul.addr %s1273, 8
          %s1275 = scalar_lea.vmem [#allocation13], %s1274
          %1276 = dma.done %s1272, 128
        $region92: #{tpu_custom_call.1} parent=87 // pred_fallthru
          _
        // Predicated region
        $region93: #{tpu_custom_call.1} parent=87 // pred_check
          %p1277 = pneg %p293
        $region94: #{tpu_custom_call.1} parent=87 // pred_check_branch
          %1279 = sbr.rel (%p1277) target = $region96
        $region95: #{tpu_custom_call.1} parent=87 // pred_region
          %s1280 = sand.u32 %s278, 1
          %s1281 = scalar_lea.sflag [#allocation15], %s1280
          %s1282 = sand.u32 %s278, 1
          %s1283 = smul.addr %s1282, 32
          %s1284 = scalar_lea.vmem [#allocation14], %s1283
          %1285 = dma.done %s1281, 512
        $region96: #{tpu_custom_call.1} parent=87 // pred_fallthru
          _
      $region88: #{tpu_custom_call.1} parent=5 // pred_fallthru
        _
    $region6: #{tpu_custom_call.1} parent=1 // loop_footer
      %s32 = sadd.s32 1, %s28
    $region7: #{tpu_custom_call.1} parent=1 // loop_footer_branch
      %27 = sbr.rel target = $region3
    $region8: #{tpu_custom_call.1} parent=1 // loop_exit
      _
    %1286 = vsyncpa [#allocation6], 1
    %s1287 = scalar_lea.sflag [#allocation6], 1
    %1288 = vsyncpa %s1287, 1
    %1289 = vsyncpa [#allocation9], 1
    %1290 = vsyncpa [#allocation12], 1
    %1291 = vsyncpa [#allocation7], 1
    %s1292 = scalar_lea.sflag [#allocation7], 1
    %1293 = vsyncpa %s1292, 1
    %1294 = vsyncpa [#allocation15], 1
    %s1295 = scalar_lea.sflag [#allocation15], 1
    %1296 = vsyncpa %s1295, 1

</llo_original>
